<compile_context>
chip_gen: v7x
topology: tpu7x:2x2x1
jax: 0.10.0
libtpu: 0.0.40
codegen_flags: <defaults>
</compile_context>

<pallas_src>
import functools

import jax
import jax.numpy as jnp
import numpy as np
from jax import lax
from jax.experimental import pallas as pl
from jax.experimental.pallas import tpu as pltpu


def _vmem_limit():
    """Generation-aware scoped-VMEM limit (~3/4 of physical per-core VMEM)."""
    try:
        cap = int(pltpu.get_tpu_info().vmem_capacity_bytes)
    except Exception:  # conservative default (fits v7x's 64 MiB)
        cap = 64 * 1024 * 1024
    return max(32 * 1024 * 1024, (cap * 3) // 4)


def _tile(extent, target):
    """Largest lane-friendly tile (multiple of 128) dividing `extent`, capped at
    `target`.  Falls back to the full extent, which is always a legal block."""
    if extent <= target:
        return extent
    t = (target // 128) * 128
    while t >= 128:
        if extent % t == 0:
            return t
        t -= 128
    # TODO(synk): pad + mask HW for pathological extents with no 128-multiple divisor.
    return extent


# --------------------------------------------------------------------------- #
# Kernel 1: query/key 1x1 convs, channels-first.
#   q = Wq @ x + bq , k = Wk @ x + bk   per (image, HW tile), bf16 MXU feeds,
#   f32 accumulation, bf16 q/k outputs for kernel 2.
# --------------------------------------------------------------------------- #
def _qk_kernel(x_ref, wq_ref, bq_ref, wk_ref, bk_ref, q_ref, k_ref):
    xb = x_ref[0].astype(jnp.bfloat16)                       # (C, hw_t)
    q = jnp.dot(wq_ref[...], xb, preferred_element_type=jnp.float32) + bq_ref[...]
    k = jnp.dot(wk_ref[...], xb, preferred_element_type=jnp.float32) + bk_ref[...]
    q_ref[0] = q.astype(q_ref.dtype)
    k_ref[0] = k.astype(k_ref.dtype)


# --------------------------------------------------------------------------- #
# Kernel 2: cross-image attention map.  grid=(B,) over query images; the full
# key tensor is VMEM-resident (constant BlockSpec).  For each key image the
# per-key-spatial max is taken online over <=key_chunk-wide correlation blocks
# (key-major -> lane-dense (1, HW_q) row), then summed over key images,
# mean/scale and per-image softmax over query spatial.
# --------------------------------------------------------------------------- #
def _attn_kernel(q_ref, k_ref, attn_ref, *, n_keys, n_key_chunks, key_chunk,
                 scale_over_b):
    q = q_ref[0]                                             # (C, HW_q) bf16
    hw_q = q.shape[1]

    def _seg_max(kc):                                        # kc: (C, chunk)
        # contract dim 0 of both operands -> (chunk, HW_q): key-spatial on
        # sublanes, query-spatial on lanes (no transposes anywhere).
        s_t = lax.dot_general(kc, q, (((0,), (0,)), ((), ())),
                              preferred_element_type=jnp.float32)
        return jnp.max(s_t, axis=0, keepdims=True)           # (1, HW_q)

    def one_key_image(j, acc):
        if n_key_chunks == 1:
            m = _seg_max(k_ref[j])
        else:
            def one_chunk(c, run_max):
                start = pl.multiple_of(c * key_chunk, 128)
                kc = k_ref[j, :, pl.ds(start, key_chunk)]
                return jnp.maximum(run_max, _seg_max(kc))
            m = lax.fori_loop(0, n_key_chunks, one_chunk,
                              jnp.full((1, hw_q), -jnp.inf, jnp.float32),
                              unroll=n_key_chunks <= 8)
        return acc + m

    acc = lax.fori_loop(0, n_keys, one_key_image,
                        jnp.zeros((1, hw_q), jnp.float32),
                        unroll=n_keys <= 8)

    logits = acc * scale_over_b                              # mean over keys + scale
    m = jnp.max(logits, axis=-1, keepdims=True)
    e = jnp.exp(logits - m)
    # Exact divide (cheap, once per query image) for closer PyTorch parity.
    attn_ref[0] = e / jnp.sum(e, axis=-1, keepdims=True)


# --------------------------------------------------------------------------- #
# Kernel 3: attention-weighted per-channel sum of x (prototype numerator).
# conv6 is a 1x1 conv (linear), so
#   mean_n(conv6(x * attn)[n]) == conv6(mean_n(x[n] * attn[n]))
# and the tiny W6/b6 finalize happens once in the wrapper.  Leading size-2
# "parallel" axis lets both TensorCores stream x on v7x.
# --------------------------------------------------------------------------- #
def _proto_kernel(x_ref, a_ref, part_ref):
    first = (pl.program_id(1) == 0) & (pl.program_id(2) == 0)
    # x: (C, hw_t), a: (1, hw_t) lane-dense row broadcast over channel sublanes.
    part = jnp.sum(x_ref[0].astype(jnp.float32) * a_ref[0],
                   axis=-1, keepdims=True)                   # (C, 1)

    @pl.when(first)
    def _init():
        part_ref[0] = part

    @pl.when(jnp.logical_not(first))
    def _acc():
        part_ref[0] += part


# --------------------------------------------------------------------------- #
# Kernel 4: final per-channel re-weighting, written directly in NCHW layout.
# --------------------------------------------------------------------------- #
def _reweight_kernel(x_ref, p_ref, o_ref):
    o_ref[0] = (x_ref[0].astype(jnp.float32) * p_ref[...]).astype(o_ref.dtype)


def coatt_layer_forward(x_nchw, params):
    """CoAttLayer.forward (training and eval branches are identical)."""
    B, C, H, W = x_nchw.shape
    HW = H * W
    N = B * HW
    scale = 1.0 / (C ** 0.5)
    vmem = _vmem_limit()

    # Free, contiguous reshape — no layout change, no HBM round trip.
    x3 = x_nchw.reshape(B, C, HW)

    wq = params["wq"].astype(jnp.bfloat16)                   # (C, C)
    wk = params["wk"].astype(jnp.bfloat16)
    bq = params["bq"].reshape(C, 1).astype(jnp.float32)
    bk = params["bk"].reshape(C, 1).astype(jnp.float32)

    hw_t = _tile(HW, 2048)
    n_hw_tiles = HW // hw_t
    key_chunk = _tile(HW, 512)
    n_key_chunks = HW // key_chunk

    # ---- kernel 1: q/k transform ------------------------------------------ #
    q3, k3 = pl.pallas_call(
        _qk_kernel,
        out_shape=(jax.ShapeDtypeStruct((B, C, HW), jnp.bfloat16),
                   jax.ShapeDtypeStruct((B, C, HW), jnp.bfloat16)),
        grid=(B, n_hw_tiles),
        in_specs=[
            pl.BlockSpec((1, C, hw_t), lambda b, t: (b, 0, t)),  # x tile
            pl.BlockSpec((C, C), lambda b, t: (0, 0)),           # Wq (bf16)
            pl.BlockSpec((C, 1), lambda b, t: (0, 0)),           # bq
            pl.BlockSpec((C, C), lambda b, t: (0, 0)),           # Wk (bf16)
            pl.BlockSpec((C, 1), lambda b, t: (0, 0)),           # bk
        ],
        out_specs=(pl.BlockSpec((1, C, hw_t), lambda b, t: (b, 0, t)),
                   pl.BlockSpec((1, C, hw_t), lambda b, t: (b, 0, t))),
        compiler_params=pltpu.CompilerParams(
            dimension_semantics=("parallel", "parallel"),
            vmem_limit_bytes=vmem),
    )(x3, wq, bq, wk, bk)

    # ---- kernel 2: cross-image attention map ------------------------------ #
    attn = pl.pallas_call(
        functools.partial(_attn_kernel, n_keys=B, n_key_chunks=n_key_chunks,
                          key_chunk=key_chunk, scale_over_b=scale / B),
        out_shape=jax.ShapeDtypeStruct((B, 1, HW), jnp.float32),
        grid=(B,),                                            # query images only
        in_specs=[
            pl.BlockSpec((1, C, HW), lambda i: (i, 0, 0)),    # q of image i
            pl.BlockSpec((B, C, HW), lambda i: (0, 0, 0)),    # resident key tensor
        ],
        out_specs=pl.BlockSpec((1, 1, HW), lambda i: (i, 0, 0)),
        compiler_params=pltpu.CompilerParams(
            dimension_semantics=("parallel",),
            vmem_limit_bytes=vmem),
    )(q3, k3)

    # ---- kernel 3: channel prototype numerator (two-TC split on v7x) ------ #
    split = 2 if (B >= 2 and B % 2 == 0) else 1
    bh = B // split
    partials = pl.pallas_call(
        _proto_kernel,
        out_shape=jax.ShapeDtypeStruct((split, C, 1), jnp.float32),
        grid=(split, bh, n_hw_tiles),
        in_specs=[
            pl.BlockSpec((1, C, hw_t), lambda h, b, t: (h * bh + b, 0, t)),
            pl.BlockSpec((1, 1, hw_t), lambda h, b, t: (h * bh + b, 0, t)),
        ],
        out_specs=pl.BlockSpec((1, C, 1), lambda h, b, t: (h, 0, 0)),
        compiler_params=pltpu.CompilerParams(
            dimension_semantics=("parallel", "arbitrary", "arbitrary"),
            vmem_limit_bytes=vmem),
    )(x3, attn)

    # Tiny finalize: proto = W6 @ mean(x*attn) + b6  — a (C,C)@(C,1) glue op.
    proto_sum = jnp.sum(partials, axis=0)                     # (C, 1)
    proto = (jnp.dot(params["w6"].astype(jnp.float32), proto_sum) * (1.0 / N)
             + params["b6"].reshape(C, 1).astype(jnp.float32))

    # ---- kernel 4: weighted_x = x * proto (NCHW output directly) ---------- #
    out3 = pl.pallas_call(
        _reweight_kernel,
        out_shape=jax.ShapeDtypeStruct((B, C, HW), x_nchw.dtype),
        grid=(B, n_hw_tiles),
        in_specs=[
            pl.BlockSpec((1, C, hw_t), lambda b, t: (b, 0, t)),
            pl.BlockSpec((C, 1), lambda b, t: (0, 0)),
        ],
        out_specs=pl.BlockSpec((1, C, hw_t), lambda b, t: (b, 0, t)),
        compiler_params=pltpu.CompilerParams(
            dimension_semantics=("parallel", "parallel"),
            vmem_limit_bytes=vmem),
    )(x3, proto)

    return out3.reshape(B, C, H, W)                           # free reshape


def _reference(x_nchw, params):
    """Pure-JAX (f32) transcription of the PyTorch forward, for verification."""
    B, C, H, W = x_nchw.shape
    HW = H * W
    scale = 1.0 / (C ** 0.5)
    xf = x_nchw.reshape(B, C, HW)
    q = jnp.einsum("oc,bcs->bos", params["wq"], xf) + params["bq"][None, :, None]
    k = jnp.einsum("oc,bcs->bos", params["wk"], xf) + params["bk"][None, :, None]
    q2 = jnp.transpose(q, (0, 2, 1)).reshape(B * HW, C)
    k2 = jnp.transpose(k, (1, 0, 2)).reshape(C, B * HW)
    xw = q2 @ k2
    xw = jnp.max(xw.reshape(B * HW, B, HW), axis=-1).mean(-1)
    xw = jax.nn.softmax(xw.reshape(B, HW) * scale, axis=-1)
    x5 = x_nchw * xw.reshape(B, 1, H, W)
    x_new = (jnp.einsum("oc,bchw->bohw", params["w6"], x5)
             + params["b6"][None, :, None, None])
    proto = jnp.mean(x_new, axis=(0, 2, 3)).reshape(1, C, 1, 1)
    return x_nchw * proto


if __name__ == "__main__":
    B, C, H, W = 2, 32, 16, 16

    key = jax.random.PRNGKey(0)
    ks = jax.random.split(key, 7)
    bound = 1.0 / (C ** 0.5)
    params = {
        "wq": jax.random.uniform(ks[0], (C, C), jnp.float32, -bound, bound),
        "bq": jax.random.uniform(ks[1], (C,), jnp.float32, -bound, bound),
        "wk": jax.random.uniform(ks[2], (C, C), jnp.float32, -bound, bound),
        "bk": jax.random.uniform(ks[3], (C,), jnp.float32, -bound, bound),
        "w6": jax.random.uniform(ks[4], (C, C), jnp.float32, -bound, bound),
        "b6": jax.random.uniform(ks[5], (C,), jnp.float32, -bound, bound),
    }
    x = jax.random.normal(ks[6], (B, C, H, W), jnp.float32)

    forward = jax.jit(coatt_layer_forward)
    out = jax.block_until_ready(forward(x, params))
    ref = jax.block_until_ready(_reference(x, params))

    assert out.shape == x.shape and out.dtype == x.dtype
    # Tolerance vs. the f32 reference is loosened because q/k are produced and
    # correlated in bf16 on the MXU (softmax itself uses an exact divide).
    np.testing.assert_allclose(np.asarray(out), np.asarray(ref),
                               rtol=3e-2, atol=3e-3)
    print("KERNEL_OK")
</pallas_src>

<mosaic_0001>
module attributes {stable_mosaic.version = 11 : i64} {
  func.func @_attn_kernel(%arg0: i32, %arg1: memref<1x32x256xbf16, #tpu.memory_space<vmem>>, %arg2: memref<2x32x256xbf16, #tpu.memory_space<vmem>>, %arg3: memref<1x1x256xf32, #tpu.memory_space<vmem>>) attributes {dimension_semantics = [#tpu.dimension_semantics<parallel>], iteration_bounds = array<i64: 2>, scalar_prefetch = 0 : i64, scratch_operands = 0 : i64, tpu.core_type = #tpu.core_type<tc>, window_params = [{transform_indices = @transform_0, window_bounds = array<i64: 1, 32, 256>}, {pipeline_mode = #tpu.pipeline_mode<synchronous>, transform_indices = @transform_1, window_bounds = array<i64: 2, 32, 256>}, {transform_indices = @transform_2, window_bounds = array<i64: 1, 1, 256>}]} {
    %c0 = arith.constant 0 : index
    %c0_0 = arith.constant 0 : index
    %c0_1 = arith.constant 0 : index
    %0 = vector.load %arg1[%c0, %c0_0, %c0_1] : memref<1x32x256xbf16, #tpu.memory_space<vmem>>, vector<1x32x256xbf16>
    %1 = vector.shape_cast %0 : vector<1x32x256xbf16> to vector<32x256xbf16>
    %cst = arith.constant 0.000000e+00 : f32
    %2 = vector.broadcast %cst : f32 to vector<1x256xf32>
    %c0_i32 = arith.constant 0 : i32
    %3 = arith.index_cast %c0_i32 : i32 to index
    %c0_2 = arith.constant 0 : index
    %c0_3 = arith.constant 0 : index
    %4 = vector.load %arg2[%3, %c0_2, %c0_3] : memref<2x32x256xbf16, #tpu.memory_space<vmem>>, vector<1x32x256xbf16>
    %5 = vector.shape_cast %4 : vector<1x32x256xbf16> to vector<32x256xbf16>
    %cst_4 = arith.constant dense<0.000000e+00> : vector<256x256xf32>
    %6 = tpu.matmul %5, %1, %cst_4 {dimension_numbers = #tpu.dot_dimension_numbers<[0], [0], [1], [1], [0, 1, 1, 1], [], []>} : vector<32x256xbf16>, vector<32x256xbf16>, vector<256x256xf32> -> vector<256x256xf32>
    %cst_5 = arith.constant dense<0xFF800000> : vector<256xf32>
    %7 = vector.multi_reduction <maximumf>, %6, %cst_5 [0] : vector<256x256xf32> to vector<256xf32>
    %8 = vector.shape_cast %7 : vector<256xf32> to vector<1x256xf32>
    %9 = arith.addf %2, %8 : vector<1x256xf32>
    %c1_i32 = arith.constant 1 : i32
    %10 = arith.index_cast %c1_i32 : i32 to index
    %c0_6 = arith.constant 0 : index
    %c0_7 = arith.constant 0 : index
    %11 = vector.load %arg2[%10, %c0_6, %c0_7] : memref<2x32x256xbf16, #tpu.memory_space<vmem>>, vector<1x32x256xbf16>
    %12 = vector.shape_cast %11 : vector<1x32x256xbf16> to vector<32x256xbf16>
    %cst_8 = arith.constant dense<0.000000e+00> : vector<256x256xf32>
    %13 = tpu.matmul %12, %1, %cst_8 {dimension_numbers = #tpu.dot_dimension_numbers<[0], [0], [1], [1], [0, 1, 1, 1], [], []>} : vector<32x256xbf16>, vector<32x256xbf16>, vector<256x256xf32> -> vector<256x256xf32>
    %cst_9 = arith.constant dense<0xFF800000> : vector<256xf32>
    %14 = vector.multi_reduction <maximumf>, %13, %cst_9 [0] : vector<256x256xf32> to vector<256xf32>
    %15 = vector.shape_cast %14 : vector<256xf32> to vector<1x256xf32>
    %16 = arith.addf %9, %15 : vector<1x256xf32>
    %c2_i32 = arith.constant 2 : i32
    %cst_10 = arith.constant 0.0883883461 : f32
    %17 = vector.broadcast %cst_10 : f32 to vector<1x256xf32>
    %18 = arith.mulf %16, %17 : vector<1x256xf32>
    %cst_11 = arith.constant dense<0xFF800000> : vector<1xf32>
    %19 = vector.multi_reduction <maximumf>, %18, %cst_11 [1] : vector<1x256xf32> to vector<1xf32>
    %20 = vector.shape_cast %19 : vector<1xf32> to vector<1x1xf32>
    %21 = vector.broadcast %20 : vector<1x1xf32> to vector<1x256xf32>
    %22 = arith.subf %18, %21 : vector<1x256xf32>
    %23 = math.exp %22 : vector<1x256xf32>
    %cst_12 = arith.constant dense<0.000000e+00> : vector<1xf32>
    %24 = vector.multi_reduction <add>, %23, %cst_12 [1] : vector<1x256xf32> to vector<1xf32>
    %25 = vector.shape_cast %24 : vector<1xf32> to vector<1x1xf32>
    %26 = vector.broadcast %25 : vector<1x1xf32> to vector<1x256xf32>
    %27 = arith.divf %23, %26 : vector<1x256xf32>
    %c0_13 = arith.constant 0 : index
    %c0_14 = arith.constant 0 : index
    %c0_15 = arith.constant 0 : index
    %28 = vector.load %arg3[%c0_13, %c0_14, %c0_15] : memref<1x1x256xf32, #tpu.memory_space<vmem>>, vector<1x1x256xf32>
    %29 = vector.shape_cast %28 : vector<1x1x256xf32> to vector<1x256xf32>
    %30 = vector.shape_cast %27 : vector<1x256xf32> to vector<1x1x256xf32>
    tpu.vector_store %arg3[%c0_13, %c0_14, %c0_15], %30 {strides = array<i32>} : memref<1x1x256xf32, #tpu.memory_space<vmem>>, vector<1x1x256xf32>,
    return
  }
  func.func @transform_0(%arg0: i32) -> (i32, i32, i32) {
    %c0_i32 = arith.constant 0 : i32
    %c0_i32_0 = arith.constant 0 : i32
    %c0_i32_1 = arith.constant 0 : i32
    return %arg0, %c0_i32, %c0_i32_0 : i32, i32, i32
  }
  func.func @transform_1(%arg0: i32) -> (i32, i32, i32) {
    %c0_i32 = arith.constant 0 : i32
    %c0_i32_0 = arith.constant 0 : i32
    %c0_i32_1 = arith.constant 0 : i32
    %c0_i32_2 = arith.constant 0 : i32
    return %c0_i32, %c0_i32_0, %c0_i32_1 : i32, i32, i32
  }
  func.func @transform_2(%arg0: i32) -> (i32, i32, i32) {
    %c0_i32 = arith.constant 0 : i32
    %c0_i32_0 = arith.constant 0 : i32
    %c0_i32_1 = arith.constant 0 : i32
    return %arg0, %c0_i32, %c0_i32_0 : i32, i32, i32
  }
}

module attributes {stable_mosaic.version = 11 : i64} {
  func.func @_qk_kernel(%arg0: i32, %arg1: i32, %arg2: memref<1x32x256xf32, #tpu.memory_space<vmem>>, %arg3: memref<32x32xbf16, #tpu.memory_space<vmem>>, %arg4: memref<32x1xf32, #tpu.memory_space<vmem>>, %arg5: memref<32x32xbf16, #tpu.memory_space<vmem>>, %arg6: memref<32x1xf32, #tpu.memory_space<vmem>>, %arg7: memref<1x32x256xbf16, #tpu.memory_space<vmem>>, %arg8: memref<1x32x256xbf16, #tpu.memory_space<vmem>>) attributes {dimension_semantics = [#tpu.dimension_semantics<parallel>, #tpu.dimension_semantics<parallel>], iteration_bounds = array<i64: 2, 1>, scalar_prefetch = 0 : i64, scratch_operands = 0 : i64, tpu.core_type = #tpu.core_type<tc>, window_params = [{transform_indices = @transform_0, window_bounds = array<i64: 1, 32, 256>}, {pipeline_mode = #tpu.pipeline_mode<synchronous>, transform_indices = @transform_1, window_bounds = array<i64: 32, 32>}, {pipeline_mode = #tpu.pipeline_mode<synchronous>, transform_indices = @transform_2, window_bounds = array<i64: 32, 1>}, {pipeline_mode = #tpu.pipeline_mode<synchronous>, transform_indices = @transform_3, window_bounds = array<i64: 32, 32>}, {pipeline_mode = #tpu.pipeline_mode<synchronous>, transform_indices = @transform_4, window_bounds = array<i64: 32, 1>}, {transform_indices = @transform_5, window_bounds = array<i64: 1, 32, 256>}, {transform_indices = @transform_6, window_bounds = array<i64: 1, 32, 256>}]} {
    %c0 = arith.constant 0 : index
    %c0_0 = arith.constant 0 : index
    %c0_1 = arith.constant 0 : index
    %0 = vector.load %arg2[%c0, %c0_0, %c0_1] : memref<1x32x256xf32, #tpu.memory_space<vmem>>, vector<1x32x256xf32>
    %1 = vector.shape_cast %0 : vector<1x32x256xf32> to vector<32x256xf32>
    %2 = arith.truncf %1 : vector<32x256xf32> to vector<32x256xbf16>
    %c0_2 = arith.constant 0 : index
    %c0_3 = arith.constant 0 : index
    %3 = vector.load %arg3[%c0_2, %c0_3] : memref<32x32xbf16, #tpu.memory_space<vmem>>, vector<32x32xbf16>
    %cst = arith.constant dense<0.000000e+00> : vector<32x256xf32>
    %4 = tpu.matmul %3, %2, %cst {dimension_numbers = #tpu.dot_dimension_numbers<[1], [0], [0], [1], [0, 0, 1, 1], [], []>} : vector<32x32xbf16>, vector<32x256xbf16>, vector<32x256xf32> -> vector<32x256xf32>
    %c0_4 = arith.constant 0 : index
    %c0_5 = arith.constant 0 : index
    %5 = vector.load %arg4[%c0_4, %c0_5] : memref<32x1xf32, #tpu.memory_space<vmem>>, vector<32x1xf32>
    %6 = vector.broadcast %5 : vector<32x1xf32> to vector<32x256xf32>
    %7 = arith.addf %4, %6 : vector<32x256xf32>
    %c0_6 = arith.constant 0 : index
    %c0_7 = arith.constant 0 : index
    %8 = vector.load %arg5[%c0_6, %c0_7] : memref<32x32xbf16, #tpu.memory_space<vmem>>, vector<32x32xbf16>
    %cst_8 = arith.constant dense<0.000000e+00> : vector<32x256xf32>
    %9 = tpu.matmul %8, %2, %cst_8 {dimension_numbers = #tpu.dot_dimension_numbers<[1], [0], [0], [1], [0, 0, 1, 1], [], []>} : vector<32x32xbf16>, vector<32x256xbf16>, vector<32x256xf32> -> vector<32x256xf32>
    %c0_9 = arith.constant 0 : index
    %c0_10 = arith.constant 0 : index
    %10 = vector.load %arg6[%c0_9, %c0_10] : memref<32x1xf32, #tpu.memory_space<vmem>>, vector<32x1xf32>
    %11 = vector.broadcast %10 : vector<32x1xf32> to vector<32x256xf32>
    %12 = arith.addf %9, %11 : vector<32x256xf32>
    %13 = arith.truncf %7 : vector<32x256xf32> to vector<32x256xbf16>
    %c0_11 = arith.constant 0 : index
    %c0_12 = arith.constant 0 : index
    %c0_13 = arith.constant 0 : index
    %14 = vector.load %arg7[%c0_11, %c0_12, %c0_13] : memref<1x32x256xbf16, #tpu.memory_space<vmem>>, vector<1x32x256xbf16>
    %15 = vector.shape_cast %14 : vector<1x32x256xbf16> to vector<32x256xbf16>
    %16 = vector.shape_cast %13 : vector<32x256xbf16> to vector<1x32x256xbf16>
    tpu.vector_store %arg7[%c0_11, %c0_12, %c0_13], %16 {strides = array<i32>} : memref<1x32x256xbf16, #tpu.memory_space<vmem>>, vector<1x32x256xbf16>,
    %17 = arith.truncf %12 : vector<32x256xf32> to vector<32x256xbf16>
    %c0_14 = arith.constant 0 : index
    %c0_15 = arith.constant 0 : index
    %c0_16 = arith.constant 0 : index
    %18 = vector.load %arg8[%c0_14, %c0_15, %c0_16] : memref<1x32x256xbf16, #tpu.memory_space<vmem>>, vector<1x32x256xbf16>
    %19 = vector.shape_cast %18 : vector<1x32x256xbf16> to vector<32x256xbf16>
    %20 = vector.shape_cast %17 : vector<32x256xbf16> to vector<1x32x256xbf16>
    tpu.vector_store %arg8[%c0_14, %c0_15, %c0_16], %20 {strides = array<i32>} : memref<1x32x256xbf16, #tpu.memory_space<vmem>>, vector<1x32x256xbf16>,
    return
  }
  func.func @transform_0(%arg0: i32, %arg1: i32) -> (i32, i32, i32) {
    %c0_i32 = arith.constant 0 : i32
    %c0_i32_0 = arith.constant 0 : i32
    return %arg0, %c0_i32, %arg1 : i32, i32, i32
  }
  func.func @transform_1(%arg0: i32, %arg1: i32) -> (i32, i32) {
    %c0_i32 = arith.constant 0 : i32
    %c0_i32_0 = arith.constant 0 : i32
    %c0_i32_1 = arith.constant 0 : i32
    return %c0_i32, %c0_i32_0 : i32, i32
  }
  func.func @transform_2(%arg0: i32, %arg1: i32) -> (i32, i32) {
    %c0_i32 = arith.constant 0 : i32
    %c0_i32_0 = arith.constant 0 : i32
    %c0_i32_1 = arith.constant 0 : i32
    return %c0_i32, %c0_i32_0 : i32, i32
  }
  func.func @transform_3(%arg0: i32, %arg1: i32) -> (i32, i32) {
    %c0_i32 = arith.constant 0 : i32
    %c0_i32_0 = arith.constant 0 : i32
    %c0_i32_1 = arith.constant 0 : i32
    return %c0_i32, %c0_i32_0 : i32, i32
  }
  func.func @transform_4(%arg0: i32, %arg1: i32) -> (i32, i32) {
    %c0_i32 = arith.constant 0 : i32
    %c0_i32_0 = arith.constant 0 : i32
    %c0_i32_1 = arith.constant 0 : i32
    return %c0_i32, %c0_i32_0 : i32, i32
  }
  func.func @transform_5(%arg0: i32, %arg1: i32) -> (i32, i32, i32) {
    %c0_i32 = arith.constant 0 : i32
    %c0_i32_0 = arith.constant 0 : i32
    return %arg0, %c0_i32, %arg1 : i32, i32, i32
  }
  func.func @transform_6(%arg0: i32, %arg1: i32) -> (i32, i32, i32) {
    %c0_i32 = arith.constant 0 : i32
    %c0_i32_0 = arith.constant 0 : i32
    return %arg0, %c0_i32, %arg1 : i32, i32, i32
  }
}

module attributes {stable_mosaic.version = 11 : i64} {
  func.func @_proto_kernel(%arg0: i32, %arg1: i32, %arg2: i32, %arg3: memref<1x32x256xf32, #tpu.memory_space<vmem>>, %arg4: memref<1x1x256xf32, #tpu.memory_space<vmem>>, %arg5: memref<1x32x1xf32, #tpu.memory_space<vmem>>) attributes {dimension_semantics = [#tpu.dimension_semantics<parallel>, #tpu.dimension_semantics<arbitrary>, #tpu.dimension_semantics<arbitrary>], iteration_bounds = array<i64: 2, 1, 1>, scalar_prefetch = 0 : i64, scratch_operands = 0 : i64, tpu.core_type = #tpu.core_type<tc>, window_params = [{transform_indices = @transform_0, window_bounds = array<i64: 1, 32, 256>}, {transform_indices = @transform_1, window_bounds = array<i64: 1, 1, 256>}, {transform_indices = @transform_2, window_bounds = array<i64: 1, 32, 1>}]} {
    %c0_i32 = arith.constant 0 : i32
    %0 = arith.cmpi eq, %arg1, %c0_i32 : i32
    %c0_i32_0 = arith.constant 0 : i32
    %1 = arith.cmpi eq, %arg2, %c0_i32_0 : i32
    %2 = arith.andi %0, %1 : i1
    %c0 = arith.constant 0 : index
    %c0_1 = arith.constant 0 : index
    %c0_2 = arith.constant 0 : index
    %3 = vector.load %arg3[%c0, %c0_1, %c0_2] : memref<1x32x256xf32, #tpu.memory_space<vmem>>, vector<1x32x256xf32>
    %4 = vector.shape_cast %3 : vector<1x32x256xf32> to vector<32x256xf32>
    %c0_3 = arith.constant 0 : index
    %c0_4 = arith.constant 0 : index
    %c0_5 = arith.constant 0 : index
    %5 = vector.load %arg4[%c0_3, %c0_4, %c0_5] : memref<1x1x256xf32, #tpu.memory_space<vmem>>, vector<1x1x256xf32>
    %6 = vector.shape_cast %5 : vector<1x1x256xf32> to vector<1x256xf32>
    %7 = vector.broadcast %6 : vector<1x256xf32> to vector<32x256xf32>
    %8 = arith.mulf %4, %7 : vector<32x256xf32>
    %cst = arith.constant dense<0.000000e+00> : vector<32xf32>
    %9 = vector.multi_reduction <add>, %8, %cst [1] : vector<32x256xf32> to vector<32xf32>
    %10 = vector.shape_cast %9 : vector<32xf32> to vector<32x1xf32>
    %11 = arith.extui %2 : i1 to i32
    %c0_i32_6 = arith.constant 0 : i32
    %12 = arith.cmpi ne, %11, %c0_i32_6 : i32
    scf.if %12 {
      %c0_8 = arith.constant 0 : index
      %c0_9 = arith.constant 0 : index
      %c0_10 = arith.constant 0 : index
      %16 = vector.load %arg5[%c0_8, %c0_9, %c0_10] : memref<1x32x1xf32, #tpu.memory_space<vmem>>, vector<1x32x1xf32>
      %17 = vector.shape_cast %16 : vector<1x32x1xf32> to vector<32x1xf32>
      %18 = vector.shape_cast %10 : vector<32x1xf32> to vector<1x32x1xf32>
      tpu.vector_store %arg5[%c0_8, %c0_9, %c0_10], %18 {strides = array<i32>} : memref<1x32x1xf32, #tpu.memory_space<vmem>>, vector<1x32x1xf32>,
    } else {
    }
    %true = arith.constant true
    %13 = arith.xori %2, %true : i1
    %14 = arith.extui %13 : i1 to i32
    %c0_i32_7 = arith.constant 0 : i32
    %15 = arith.cmpi ne, %14, %c0_i32_7 : i32
    scf.if %15 {
      %c0_8 = arith.constant 0 : index
      %c0_9 = arith.constant 0 : index
      %c0_10 = arith.constant 0 : index
      %16 = vector.load %arg5[%c0_8, %c0_9, %c0_10] : memref<1x32x1xf32, #tpu.memory_space<vmem>>, vector<1x32x1xf32>
      %17 = vector.shape_cast %16 : vector<1x32x1xf32> to vector<32x1xf32>
      %18 = arith.addf %17, %10 : vector<32x1xf32>
      %c0_11 = arith.constant 0 : index
      %c0_12 = arith.constant 0 : index
      %c0_13 = arith.constant 0 : index
      %19 = vector.load %arg5[%c0_11, %c0_12, %c0_13] : memref<1x32x1xf32, #tpu.memory_space<vmem>>, vector<1x32x1xf32>
      %20 = vector.shape_cast %19 : vector<1x32x1xf32> to vector<32x1xf32>
      %21 = vector.shape_cast %18 : vector<32x1xf32> to vector<1x32x1xf32>
      tpu.vector_store %arg5[%c0_11, %c0_12, %c0_13], %21 {strides = array<i32>} : memref<1x32x1xf32, #tpu.memory_space<vmem>>, vector<1x32x1xf32>,
    } else {
    }
    return
  }
  func.func @transform_0(%arg0: i32, %arg1: i32, %arg2: i32) -> (i32, i32, i32) {
    %c1_i32 = arith.constant 1 : i32
    %0 = arith.muli %arg0, %c1_i32 : i32
    %1 = arith.addi %0, %arg1 : i32
    %c0_i32 = arith.constant 0 : i32
    %c0_i32_0 = arith.constant 0 : i32
    return %1, %c0_i32, %arg2 : i32, i32, i32
  }
  func.func @transform_1(%arg0: i32, %arg1: i32, %arg2: i32) -> (i32, i32, i32) {
    %c1_i32 = arith.constant 1 : i32
    %0 = arith.muli %arg0, %c1_i32 : i32
    %1 = arith.addi %0, %arg1 : i32
    %c0_i32 = arith.constant 0 : i32
    %c0_i32_0 = arith.constant 0 : i32
    return %1, %c0_i32, %arg2 : i32, i32, i32
  }
  func.func @transform_2(%arg0: i32, %arg1: i32, %arg2: i32) -> (i32, i32, i32) {
    %c0_i32 = arith.constant 0 : i32
    %c0_i32_0 = arith.constant 0 : i32
    %c0_i32_1 = arith.constant 0 : i32
    return %arg0, %c0_i32, %c0_i32_0 : i32, i32, i32
  }
}

module attributes {stable_mosaic.version = 11 : i64} {
  func.func @_reweight_kernel(%arg0: i32, %arg1: i32, %arg2: memref<1x32x256xf32, #tpu.memory_space<vmem>>, %arg3: memref<32x1xf32, #tpu.memory_space<vmem>>, %arg4: memref<1x32x256xf32, #tpu.memory_space<vmem>>) attributes {dimension_semantics = [#tpu.dimension_semantics<parallel>, #tpu.dimension_semantics<parallel>], iteration_bounds = array<i64: 2, 1>, scalar_prefetch = 0 : i64, scratch_operands = 0 : i64, tpu.core_type = #tpu.core_type<tc>, window_params = [{transform_indices = @transform_0, window_bounds = array<i64: 1, 32, 256>}, {pipeline_mode = #tpu.pipeline_mode<synchronous>, transform_indices = @transform_1, window_bounds = array<i64: 32, 1>}, {transform_indices = @transform_2, window_bounds = array<i64: 1, 32, 256>}]} {
    %c0 = arith.constant 0 : index
    %c0_0 = arith.constant 0 : index
    %c0_1 = arith.constant 0 : index
    %0 = vector.load %arg2[%c0, %c0_0, %c0_1] : memref<1x32x256xf32, #tpu.memory_space<vmem>>, vector<1x32x256xf32>
    %1 = vector.shape_cast %0 : vector<1x32x256xf32> to vector<32x256xf32>
    %c0_2 = arith.constant 0 : index
    %c0_3 = arith.constant 0 : index
    %2 = vector.load %arg3[%c0_2, %c0_3] : memref<32x1xf32, #tpu.memory_space<vmem>>, vector<32x1xf32>
    %3 = vector.broadcast %2 : vector<32x1xf32> to vector<32x256xf32>
    %4 = arith.mulf %1, %3 : vector<32x256xf32>
    %c0_4 = arith.constant 0 : index
    %c0_5 = arith.constant 0 : index
    %c0_6 = arith.constant 0 : index
    %5 = vector.load %arg4[%c0_4, %c0_5, %c0_6] : memref<1x32x256xf32, #tpu.memory_space<vmem>>, vector<1x32x256xf32>
    %6 = vector.shape_cast %5 : vector<1x32x256xf32> to vector<32x256xf32>
    %7 = vector.shape_cast %4 : vector<32x256xf32> to vector<1x32x256xf32>
    tpu.vector_store %arg4[%c0_4, %c0_5, %c0_6], %7 {strides = array<i32>} : memref<1x32x256xf32, #tpu.memory_space<vmem>>, vector<1x32x256xf32>,
    return
  }
  func.func @transform_0(%arg0: i32, %arg1: i32) -> (i32, i32, i32) {
    %c0_i32 = arith.constant 0 : i32
    %c0_i32_0 = arith.constant 0 : i32
    return %arg0, %c0_i32, %arg1 : i32, i32, i32
  }
  func.func @transform_1(%arg0: i32, %arg1: i32) -> (i32, i32) {
    %c0_i32 = arith.constant 0 : i32
    %c0_i32_0 = arith.constant 0 : i32
    %c0_i32_1 = arith.constant 0 : i32
    return %c0_i32, %c0_i32_0 : i32, i32
  }
  func.func @transform_2(%arg0: i32, %arg1: i32) -> (i32, i32, i32) {
    %c0_i32 = arith.constant 0 : i32
    %c0_i32_0 = arith.constant 0 : i32
    return %arg0, %c0_i32, %arg1 : i32, i32, i32
  }
}

</mosaic_0001>

<llo_original>
// kernel: coatt_layer_forward.6
$region0: #{coatt_layer_forward.6}
  #allocation0 [shape = 'u32[]', space=smem, size = 0x4, offset = 0x4, fixed_abs, tag = 'smem constant byte address 0x4 - core index']
  #allocation1 [shape = 'u32[144,128]{1,0:T(1,128)}', space=vmem, size = 0x12000, scoped, tag = 'internal scratch']
  %s0 = inlined_call_operand.vmem [shape: f32[2,32,256], index: 0, kind: input, shape index: {}]
  %s1 = inlined_call_operand.vmem [shape: f32[2,1,256], index: 1, kind: input, shape index: {}]
  %s2 = inlined_call_operand.vmem [shape: f32[2,32,1], index: 2, kind: output, shape index: {}]
  %s3 = sld [smem:[#allocation0]]
  $region49: #{coatt_layer_forward.6} parent=0
    _
  %s5 = ssub.s32 1, %s3
  %s6 = scalar_select 0, %s5, %s3
  loop: start=0, step=1, limit=4
  $region2: #{coatt_layer_forward.6} parent=0 // loop_pre_header
    _
  $region3: #{coatt_layer_forward.6} parent=0 // loop_header
    %s8 = sphi 0, %s12
    %p9 = scmp.ge.s32.totalorder %s8, 4
    %s15 = sphi 0, %s34
    %s16 = sphi 0, %s30
    %s17 = sphi 0, %s26
    %s18 = sphi 0, %s15
    %s19 = sphi 0, %s16
    %s20 = sphi 0, %s17
    %s21 = sphi 0, %s18
    %s22 = sphi 0, %s19
    %s23 = sphi 0, %s20
    %s41 = sphi 0, %s43
    %s44 = sphi 0, %s41
    %s45 = sphi 0, %s44
    %s61 = sphi 0, %s45
    %s71 = sphi 0, %s73
    %s74 = sphi 0, %s71
    %s75 = sphi 0, %s74
    %s91 = sphi 0, %s75
    %s97 = sphi 0, %s99
    %s100 = sphi 0, %s97
    %s101 = sphi 0, %s100
    %s117 = sphi 0, %s101
  $region4: #{coatt_layer_forward.6} parent=0 // loop_header_branch
    %11 = sbr.rel (%p9) target = $region8
  $region5: #{coatt_layer_forward.6} parent=0 // loop_body
    %s13 = ssub.s32 %s8, 1
    %s14 = ssub.s32 %s8, 2
    %s24 = sadd.s32 1, %s17
    %p25 = scmp.ge.s32.totalorder %s24, 1
    %s26 = scalar_select %p25, 0, %s24
    %s27 = sadd.s32 1, %s16
    %s28 = scalar_select %p25, %s27, %s16
    %p29 = scmp.ge.s32.totalorder %s28, 1
    %s30 = scalar_select %p29, 0, %s28
    %s31 = sadd.s32 1, %s15
    %s32 = scalar_select %p29, %s31, %s15
    %p33 = scmp.ge.s32.totalorder %s32, 2
    %s34 = scalar_select %p33, 0, %s32
    %s35 = sadd.s32 %s15, %s16
    %s36 = sadd.s32 %s34, %s30
    %s37 = ssub.s32 %s35, %s36
    %s38 = ssub.s32 %s17, %s26
    %s39 = sor.u32 %s37, %s38
    %p40 = scmp.eq.s32.totalorder %s39, 0
    %s42 = sadd.s32 %s41, 1
    %s43 = scalar_select %p40, %s41, %s42
    %p46 = pneg %p40
    %p47 = scmp.eq.s32.totalorder %s8, 1
    %p48 = por %p46, %p47
    %p49 = scmp.ne.s32.totalorder %s41, %s44
    %p50 = scmp.eq.s32.totalorder %s8, 0
    %p51 = por %p49, %p50
    %p52 = scmp.ne.s32.totalorder %s41, %s44
    %p53 = scmp.eq.s32.totalorder %s13, 1
    %p54 = por %p52, %p53
    %p55 = scmp.ne.s32.totalorder %s44, %s45
    %p56 = scmp.eq.s32.totalorder %s13, 0
    %p57 = por %p55, %p56
    %p58 = scmp.ne.s32.totalorder %s44, %s45
    %p59 = scmp.eq.s32.totalorder %s14, 1
    %p60 = por %p58, %p59
    %p62 = scmp.ne.s32.totalorder %s45, %s61
    %p63 = scmp.eq.s32.totalorder %s14, 0
    %p64 = por %p62, %p63
    %s65 = sadd.s32 %s15, %s16
    %s66 = sadd.s32 %s34, %s30
    %s67 = ssub.s32 %s65, %s66
    %s68 = ssub.s32 %s17, %s26
    %s69 = sor.u32 %s67, %s68
    %p70 = scmp.eq.s32.totalorder %s69, 0
    %s72 = sadd.s32 %s71, 1
    %s73 = scalar_select %p70, %s71, %s72
    %p76 = pneg %p70
    %p77 = scmp.eq.s32.totalorder %s8, 1
    %p78 = por %p76, %p77
    %p79 = scmp.ne.s32.totalorder %s71, %s74
    %p80 = scmp.eq.s32.totalorder %s8, 0
    %p81 = por %p79, %p80
    %p82 = scmp.ne.s32.totalorder %s71, %s74
    %p83 = scmp.eq.s32.totalorder %s13, 1
    %p84 = por %p82, %p83
    %p85 = scmp.ne.s32.totalorder %s74, %s75
    %p86 = scmp.eq.s32.totalorder %s13, 0
    %p87 = por %p85, %p86
    %p88 = scmp.ne.s32.totalorder %s74, %s75
    %p89 = scmp.eq.s32.totalorder %s14, 1
    %p90 = por %p88, %p89
    %p92 = scmp.ne.s32.totalorder %s75, %s91
    %p93 = scmp.eq.s32.totalorder %s14, 0
    %p94 = por %p92, %p93
    %s95 = ssub.s32 %s15, %s34
    %p96 = scmp.eq.s32.totalorder %s95, 0
    %s98 = sadd.s32 %s97, 1
    %s99 = scalar_select %p96, %s97, %s98
    %p102 = pneg %p96
    %p103 = scmp.eq.s32.totalorder %s8, 1
    %p104 = por %p102, %p103
    %p105 = scmp.ne.s32.totalorder %s97, %s100
    %p106 = scmp.eq.s32.totalorder %s8, 0
    %p107 = por %p105, %p106
    %p108 = scmp.ne.s32.totalorder %s97, %s100
    %p109 = scmp.eq.s32.totalorder %s13, 1
    %p110 = por %p108, %p109
    %p111 = scmp.ne.s32.totalorder %s100, %s101
    %p112 = scmp.eq.s32.totalorder %s13, 0
    %p113 = por %p111, %p112
    %p114 = scmp.ne.s32.totalorder %s100, %s101
    %p115 = scmp.eq.s32.totalorder %s14, 1
    %p116 = por %p114, %p115
    %p118 = scmp.ne.s32.totalorder %s101, %s117
    %p119 = scmp.eq.s32.totalorder %s14, 0
    %p120 = por %p118, %p119
    %p121 = scmp.le.s32.totalorder 1, %s8
    %p122 = scmp.lt.s32.totalorder %s8, 3
    %p123 = pnand %p121, %p122
    %p124 = pneg %p123
    // Predicated region
    $region9: #{coatt_layer_forward.6} parent=5 // pred_check
      _
    $region10: #{coatt_layer_forward.6} parent=5 // pred_check_branch
      %126 = sbr.rel (%p123) target = $region12
    $region11: #{coatt_layer_forward.6} parent=5 // pred_region
      %s127 = ssub.s32 %s8, 1
    $region12: #{coatt_layer_forward.6} parent=5 // pred_fallthru
      _
    %p128 = scmp.lt.s32.totalorder %s8, 2
    // Predicated region
    $region13: #{coatt_layer_forward.6} parent=5 // pred_check
      %p129 = pneg %p128
    $region14: #{coatt_layer_forward.6} parent=5 // pred_check_branch
      %131 = sbr.rel (%p129) target = $region16
    $region15: #{coatt_layer_forward.6} parent=5 // pred_region
      // Predicated region
      $region17: #{coatt_layer_forward.6} parent=15 // pred_check
        %p132 = pneg %p51
      $region18: #{coatt_layer_forward.6} parent=15 // pred_check_branch
        %134 = sbr.rel (%p132) target = $region20
      $region19: #{coatt_layer_forward.6} parent=15 // pred_region
        %s135 = sadd.s32 %s15, %s16
        %s136 = smul.u32 2, %s17
        %p137 = scmp.lt.s32.totalorder %s135, 1
        %s138 = scalar_select %p137, %s135, 1
        %p139 = scmp.lt.s32.totalorder %s136, 1
        %s140 = scalar_select %p139, %s136, 1
        %s141 = smul.addr %s138, 8
        %s142 = sadd.s32 %s140, %s141
        %s143 = smul.addr %s142, 8
        %s144 = scalar_lea.vmem %s0, %s143
        %s145 = sadd.s32 %s15, %s16
        %s146 = smul.u32 2, %s17
      $region20: #{coatt_layer_forward.6} parent=15 // pred_fallthru
        _
      // Predicated region
      $region21: #{coatt_layer_forward.6} parent=15 // pred_check
        %p147 = pneg %p81
      $region22: #{coatt_layer_forward.6} parent=15 // pred_check_branch
        %149 = sbr.rel (%p147) target = $region24
      $region23: #{coatt_layer_forward.6} parent=15 // pred_region
        %s150 = sadd.s32 %s15, %s16
        %s151 = smul.u32 2, %s17
        %p152 = scmp.lt.s32.totalorder %s150, 1
        %s153 = scalar_select %p152, %s150, 1
        %p154 = scmp.lt.s32.totalorder %s151, 1
        %s155 = scalar_select %p154, %s151, 1
        %s156 = smul.addr %s153, 2
        %s157 = sadd.s32 %s155, %s156
        %s158 = scalar_lea.vmem %s1, %s157
        %s159 = sadd.s32 %s15, %s16
        %s160 = smul.u32 2, %s17
      $region24: #{coatt_layer_forward.6} parent=15 // pred_fallthru
        _
    $region16: #{coatt_layer_forward.6} parent=5 // pred_fallthru
      _
    %p161 = scmp.le.s32.totalorder 1, %s8
    %p162 = scmp.lt.s32.totalorder %s8, 3
    %p163 = pnand %p161, %p162
    %p164 = pneg %p163
    // Predicated region
    $region25: #{coatt_layer_forward.6} parent=5 // pred_check
      _
    $region26: #{coatt_layer_forward.6} parent=5 // pred_check_branch
      %166 = sbr.rel (%p163) target = $region28
    $region27: #{coatt_layer_forward.6} parent=5 // pred_region
      %s167 = ssub.s32 %s8, 1
      %s168 = sadd.s32 %s18, %s19
      %s169 = smul.u32 2, %s20
      %p170 = scmp.lt.s32.totalorder %s168, 1
      %s171 = scalar_select %p170, %s168, 1
      %p172 = scmp.lt.s32.totalorder %s169, 1
      %s173 = scalar_select %p172, %s169, 1
      %s174 = smul.addr %s171, 8
      %s175 = sadd.s32 %s173, %s174
      %s176 = smul.addr %s175, 8
      %s177 = scalar_lea.vmem %s0, %s176
      %p178 = pneg %p57
      %p179 = pneg %p54
      %s180 = sadd.s32 %s18, %s19
      %s181 = smul.u32 2, %s20
      %p182 = scmp.lt.s32.totalorder %s180, 1
      %s183 = scalar_select %p182, %s180, 1
      %p184 = scmp.lt.s32.totalorder %s181, 1
      %s185 = scalar_select %p184, %s181, 1
      %s186 = smul.addr %s183, 2
      %s187 = sadd.s32 %s185, %s186
      %s188 = scalar_lea.vmem %s1, %s187
      %p189 = pneg %p87
      %p190 = pneg %p84
      %p191 = pneg %p113
      %p192 = pneg %p110
      %p193 = scmp.lt.s32.totalorder %s18, 1
      %s194 = scalar_select %p193, %s18, 1
      %s195 = smul.addr %s194, 4
      %s196 = smul.addr %s195, 8
      %s197 = scalar_lea.vmem %s2, %s196
      %s198 = sadd.s32 %s18, %s19
      %s199 = smul.u32 2, %s20
      %p200 = scmp.lt.s32.totalorder %s198, 1
      %s201 = scalar_select %p200, %s198, 1
      %p202 = scmp.lt.s32.totalorder %s199, 1
      %s203 = scalar_select %p202, %s199, 1
      %s204 = smul.addr %s201, 8
      %s205 = sadd.s32 %s203, %s204
      %s206 = smul.addr %s205, 8
      %s207 = scalar_lea.vmem %s0, %s206
      %s208 = sadd.s32 %s18, %s19
      %s209 = smul.u32 2, %s20
      %s210 = sadd.s32 %s18, %s19
      %s211 = smul.u32 2, %s20
      %p212 = scmp.lt.s32.totalorder %s210, 1
      %s213 = scalar_select %p212, %s210, 1
      %p214 = scmp.lt.s32.totalorder %s211, 1
      %s215 = scalar_select %p214, %s211, 1
      %s216 = smul.addr %s213, 2
      %s217 = sadd.s32 %s215, %s216
      %s218 = scalar_lea.vmem %s1, %s217
      %s219 = sadd.s32 %s18, %s19
      %s220 = smul.u32 2, %s20
      %p221 = scmp.lt.s32.totalorder %s18, 1
      %s222 = scalar_select %p221, %s18, 1
      %s223 = smul.addr %s222, 4
      %s224 = smul.addr %s223, 8
      %s225 = scalar_lea.vmem %s2, %s224
      %p226 = scmp.eq.s32.totalorder %s19, 0
      %p227 = scmp.eq.s32.totalorder %s20, 0
      %p228 = pnand %p226, %p227
      %p229 = pneg %p228
      %v230 = vld [vmem:[%s207] sm:$0xff]
      %v231 = vld [vmem:[%s207 + $0x8] sm:$0xff]
      %v232 = vld [vmem:[%s207 + $0x10] sm:$0xff]
      %v233 = vld [vmem:[%s207 + $0x18] sm:$0xff]
      %v234 = vld [vmem:[%s207 + $0x20] sm:$0xff]
      %v235 = vld [vmem:[%s207 + $0x28] sm:$0xff]
      %v236 = vld [vmem:[%s207 + $0x30] sm:$0xff]
      %v237 = vld [vmem:[%s207 + $0x38] sm:$0xff]
      %v238 = vld [vmem:[%s218] sm:$0x3]
      %v240 = vlaneseq
      %v241 = vshrl.u32 %v240, 7
      %v242 = vsub.s32 0, %v241
      %v243 = vrot.slane %v238, %v242
      %v244 = vlaneseq
      %v245 = vshrl.u32 %v244, 7
      %v246 = vsub.s32 1, %v245
      %v247 = vrot.slane %v238, %v246
      %v250 = vmul.f32 %v230, %v243
      %v251 = vmul.f32 %v231, %v247
      %v252 = vmul.f32 %v232, %v243
      %v253 = vmul.f32 %v233, %v247
      %v254 = vmul.f32 %v234, %v243
      %v255 = vmul.f32 %v235, %v247
      %v256 = vmul.f32 %v236, %v243
      %v257 = vmul.f32 %v237, %v247
      %v258 = vadd.f32 %v250, %v251
      %259 = vadd.xlane.f32.xlu0 %v258
      %v260 = vpop.xlane.xlu0 %259
      %v261 = vadd.f32 %v252, %v253
      %262 = vadd.xlane.f32.xlu0 %v261
      %v263 = vpop.xlane.xlu0 %262
      %v264 = vadd.f32 %v254, %v255
      %265 = vadd.xlane.f32.xlu0 %v264
      %v266 = vpop.xlane.xlu0 %265
      %v267 = vadd.f32 %v256, %v257
      %268 = vadd.xlane.f32.xlu0 %v267
      %v269 = vpop.xlane.xlu0 %268
      // Predicated region
      $region29: #{coatt_layer_forward.6} parent=27 // pred_check
        _
      $region30: #{coatt_layer_forward.6} parent=27 // pred_check_branch
        %271 = sbr.rel (%p228) target = $region32
      $region31: #{coatt_layer_forward.6} parent=27 // pred_region
        %vm272 = vcmask 7168
        %273 = vst.msk [vmem:[%s225] sm:$0xff] %vm272, %v260
        %274 = vst.msk [vmem:[%s225 + $0x8] sm:$0xff] %vm272, %v263
        %275 = vst.msk [vmem:[%s225 + $0x10] sm:$0xff] %vm272, %v266
        %276 = vst.msk [vmem:[%s225 + $0x18] sm:$0xff] %vm272, %v269
      $region32: #{coatt_layer_forward.6} parent=27 // pred_fallthru
        _
      %p277 = pneg %p229
      // Predicated region
      $region33: #{coatt_layer_forward.6} parent=27 // pred_check
        _
      $region34: #{coatt_layer_forward.6} parent=27 // pred_check_branch
        %279 = sbr.rel (%p229) target = $region36
      $region35: #{coatt_layer_forward.6} parent=27 // pred_region
        %v280 = vld [vmem:[%s225] sm:$0xff]
        %v281 = vld [vmem:[%s225 + $0x8] sm:$0xff]
        %v282 = vld [vmem:[%s225 + $0x10] sm:$0xff]
        %v283 = vld [vmem:[%s225 + $0x18] sm:$0xff]
        %v284 = vadd.f32 %v280, %v260
        %v285 = vadd.f32 %v281, %v263
        %v286 = vadd.f32 %v282, %v266
        %v287 = vadd.f32 %v283, %v269
        %vm288 = vcmask 7168
        %289 = vst.msk [vmem:[%s225] sm:$0xff] %vm288, %v284
        %290 = vst.msk [vmem:[%s225 + $0x8] sm:$0xff] %vm288, %v285
        %291 = vst.msk [vmem:[%s225 + $0x10] sm:$0xff] %vm288, %v286
        %292 = vst.msk [vmem:[%s225 + $0x18] sm:$0xff] %vm288, %v287
      $region36: #{coatt_layer_forward.6} parent=27 // pred_fallthru
        _
      %p293 = scmp.lt.s32.totalorder %s18, 1
      %s294 = scalar_select %p293, %s18, 1
      %s295 = smul.addr %s294, 4
      %s296 = smul.addr %s295, 8
      %s297 = scalar_lea.vmem %s2, %s296
      // Predicated region
      $region37: #{coatt_layer_forward.6} parent=27 // pred_check
        %p298 = pneg %p110
      $region38: #{coatt_layer_forward.6} parent=27 // pred_check_branch
        %300 = sbr.rel (%p298) target = $region40
      $region39: #{coatt_layer_forward.6} parent=27 // pred_region
        _
      $region40: #{coatt_layer_forward.6} parent=27 // pred_fallthru
        _
    $region28: #{coatt_layer_forward.6} parent=5 // pred_fallthru
      _
    %p301 = scmp.le.s32.totalorder 2, %s8
    // Predicated region
    $region41: #{coatt_layer_forward.6} parent=5 // pred_check
      %p302 = pneg %p301
    $region42: #{coatt_layer_forward.6} parent=5 // pred_check_branch
      %304 = sbr.rel (%p302) target = $region44
    $region43: #{coatt_layer_forward.6} parent=5 // pred_region
      %s305 = ssub.s32 %s8, 2
      // Predicated region
      $region45: #{coatt_layer_forward.6} parent=43 // pred_check
        %p306 = pneg %p116
      $region46: #{coatt_layer_forward.6} parent=43 // pred_check_branch
        %308 = sbr.rel (%p306) target = $region48
      $region47: #{coatt_layer_forward.6} parent=43 // pred_region
        %p309 = scmp.lt.s32.totalorder %s21, 1
        %s310 = scalar_select %p309, %s21, 1
        %s311 = smul.addr %s310, 4
        %s312 = smul.addr %s311, 8
        %s313 = scalar_lea.vmem %s2, %s312
      $region48: #{coatt_layer_forward.6} parent=43 // pred_fallthru
        _
    $region44: #{coatt_layer_forward.6} parent=5 // pred_fallthru
      _
  $region6: #{coatt_layer_forward.6} parent=0 // loop_footer
    %s12 = sadd.s32 1, %s8
  $region7: #{coatt_layer_forward.6} parent=0 // loop_footer_branch
    %7 = sbr.rel target = $region3
  $region8: #{coatt_layer_forward.6} parent=0 // loop_exit
    _

// kernel: coatt_layer_forward.4
$region0: #{coatt_layer_forward.4}
  #allocation0 [shape = 'u32[]', space=smem, size = 0x4, offset = 0x4, fixed_abs, tag = 'smem constant byte address 0x4 - core index']
  #allocation1 [shape = 'u32[144,128]{1,0:T(1,128)}', space=vmem, size = 0x12000, scoped, tag = 'internal scratch']
  %s0 = inlined_call_operand.vmem [shape: f32[2,32,256], index: 0, kind: input, shape index: {}]
  %s1 = inlined_call_operand.vmem [shape: bf16[32,32], index: 1, kind: input, shape index: {}]
  %s2 = inlined_call_operand.vmem [shape: f32[32,1], index: 2, kind: input, shape index: {}]
  %s3 = inlined_call_operand.vmem [shape: bf16[32,32], index: 3, kind: input, shape index: {}]
  %s4 = inlined_call_operand.vmem [shape: f32[32,1], index: 4, kind: input, shape index: {}]
  %s5 = inlined_call_operand.vmem [shape: bf16[2,32,256], index: 5, kind: output, shape index: {0}]
  %s6 = inlined_call_operand.vmem [shape: bf16[2,32,256], index: 6, kind: output, shape index: {1}]
  %7 = xla_tuple %s5, %s6
  %s8 = sld [smem:[#allocation0]]
  $region61: #{coatt_layer_forward.4} parent=0
    _
  %s10 = ssub.s32 1, %s8
  %s11 = scalar_select 0, %s10, %s8
  loop: start=0, step=1, limit=4
  $region2: #{coatt_layer_forward.4} parent=0 // loop_pre_header
    _
  $region3: #{coatt_layer_forward.4} parent=0 // loop_header
    %s13 = sphi 0, %s17
    %p14 = scmp.ge.s32.totalorder %s13, 4
    %s20 = sphi 0, %s32
    %s21 = sphi 0, %s28
    %s22 = sphi 0, %s20
    %s23 = sphi 0, %s21
    %s24 = sphi 0, %s22
    %s25 = sphi 0, %s23
    %s37 = sphi 0, %s39
    %s40 = sphi 0, %s37
    %s41 = sphi 0, %s40
    %s57 = sphi 0, %s41
    %s61 = sphi 0, %s61
    %s63 = sphi 0, %s61
    %s64 = sphi 0, %s63
    %s78 = sphi 0, %s64
    %s82 = sphi 0, %s82
    %s84 = sphi 0, %s82
    %s85 = sphi 0, %s84
    %s99 = sphi 0, %s85
    %s103 = sphi 0, %s103
    %s105 = sphi 0, %s103
    %s106 = sphi 0, %s105
    %s120 = sphi 0, %s106
    %s124 = sphi 0, %s124
    %s126 = sphi 0, %s124
    %s127 = sphi 0, %s126
    %s141 = sphi 0, %s127
    %s149 = sphi 0, %s151
    %s152 = sphi 0, %s149
    %s153 = sphi 0, %s152
    %s169 = sphi 0, %s153
    %s177 = sphi 0, %s179
    %s180 = sphi 0, %s177
    %s181 = sphi 0, %s180
    %s197 = sphi 0, %s181
  $region4: #{coatt_layer_forward.4} parent=0 // loop_header_branch
    %16 = sbr.rel (%p14) target = $region8
  $region5: #{coatt_layer_forward.4} parent=0 // loop_body
    %s18 = ssub.s32 %s13, 1
    %s19 = ssub.s32 %s13, 2
    %s26 = sadd.s32 1, %s21
    %p27 = scmp.ge.s32.totalorder %s26, 1
    %s28 = scalar_select %p27, 0, %s26
    %s29 = sadd.s32 1, %s20
    %s30 = scalar_select %p27, %s29, %s20
    %p31 = scmp.ge.s32.totalorder %s30, 2
    %s32 = scalar_select %p31, 0, %s30
    %s33 = ssub.s32 %s20, %s32
    %s34 = ssub.s32 %s21, %s28
    %s35 = sor.u32 %s33, %s34
    %p36 = scmp.eq.s32.totalorder %s35, 0
    %s38 = sadd.s32 %s37, 1
    %s39 = scalar_select %p36, %s37, %s38
    %p42 = pneg %p36
    %p43 = scmp.eq.s32.totalorder %s13, 1
    %p44 = por %p42, %p43
    %p45 = scmp.ne.s32.totalorder %s37, %s40
    %p46 = scmp.eq.s32.totalorder %s13, 0
    %p47 = por %p45, %p46
    %p48 = scmp.ne.s32.totalorder %s37, %s40
    %p49 = scmp.eq.s32.totalorder %s18, 1
    %p50 = por %p48, %p49
    %p51 = scmp.ne.s32.totalorder %s40, %s41
    %p52 = scmp.eq.s32.totalorder %s18, 0
    %p53 = por %p51, %p52
    %p54 = scmp.ne.s32.totalorder %s40, %s41
    %p55 = scmp.eq.s32.totalorder %s19, 1
    %p56 = por %p54, %p55
    %p58 = scmp.ne.s32.totalorder %s41, %s57
    %p59 = scmp.eq.s32.totalorder %s19, 0
    %p60 = por %p58, %p59
    %s62 = sadd.s32 %s61, 1
    %p65 = scmp.eq.s32.totalorder %s13, 1
    %p66 = scmp.ne.s32.totalorder %s61, %s63
    %p67 = scmp.eq.s32.totalorder %s13, 0
    %p68 = por %p66, %p67
    %p69 = scmp.ne.s32.totalorder %s61, %s63
    %p70 = scmp.eq.s32.totalorder %s18, 1
    %p71 = por %p69, %p70
    %p72 = scmp.ne.s32.totalorder %s63, %s64
    %p73 = scmp.eq.s32.totalorder %s18, 0
    %p74 = por %p72, %p73
    %p75 = scmp.ne.s32.totalorder %s63, %s64
    %p76 = scmp.eq.s32.totalorder %s19, 1
    %p77 = por %p75, %p76
    %p79 = scmp.ne.s32.totalorder %s64, %s78
    %p80 = scmp.eq.s32.totalorder %s19, 0
    %p81 = por %p79, %p80
    %s83 = sadd.s32 %s82, 1
    %p86 = scmp.eq.s32.totalorder %s13, 1
    %p87 = scmp.ne.s32.totalorder %s82, %s84
    %p88 = scmp.eq.s32.totalorder %s13, 0
    %p89 = por %p87, %p88
    %p90 = scmp.ne.s32.totalorder %s82, %s84
    %p91 = scmp.eq.s32.totalorder %s18, 1
    %p92 = por %p90, %p91
    %p93 = scmp.ne.s32.totalorder %s84, %s85
    %p94 = scmp.eq.s32.totalorder %s18, 0
    %p95 = por %p93, %p94
    %p96 = scmp.ne.s32.totalorder %s84, %s85
    %p97 = scmp.eq.s32.totalorder %s19, 1
    %p98 = por %p96, %p97
    %p100 = scmp.ne.s32.totalorder %s85, %s99
    %p101 = scmp.eq.s32.totalorder %s19, 0
    %p102 = por %p100, %p101
    %s104 = sadd.s32 %s103, 1
    %p107 = scmp.eq.s32.totalorder %s13, 1
    %p108 = scmp.ne.s32.totalorder %s103, %s105
    %p109 = scmp.eq.s32.totalorder %s13, 0
    %p110 = por %p108, %p109
    %p111 = scmp.ne.s32.totalorder %s103, %s105
    %p112 = scmp.eq.s32.totalorder %s18, 1
    %p113 = por %p111, %p112
    %p114 = scmp.ne.s32.totalorder %s105, %s106
    %p115 = scmp.eq.s32.totalorder %s18, 0
    %p116 = por %p114, %p115
    %p117 = scmp.ne.s32.totalorder %s105, %s106
    %p118 = scmp.eq.s32.totalorder %s19, 1
    %p119 = por %p117, %p118
    %p121 = scmp.ne.s32.totalorder %s106, %s120
    %p122 = scmp.eq.s32.totalorder %s19, 0
    %p123 = por %p121, %p122
    %s125 = sadd.s32 %s124, 1
    %p128 = scmp.eq.s32.totalorder %s13, 1
    %p129 = scmp.ne.s32.totalorder %s124, %s126
    %p130 = scmp.eq.s32.totalorder %s13, 0
    %p131 = por %p129, %p130
    %p132 = scmp.ne.s32.totalorder %s124, %s126
    %p133 = scmp.eq.s32.totalorder %s18, 1
    %p134 = por %p132, %p133
    %p135 = scmp.ne.s32.totalorder %s126, %s127
    %p136 = scmp.eq.s32.totalorder %s18, 0
    %p137 = por %p135, %p136
    %p138 = scmp.ne.s32.totalorder %s126, %s127
    %p139 = scmp.eq.s32.totalorder %s19, 1
    %p140 = por %p138, %p139
    %p142 = scmp.ne.s32.totalorder %s127, %s141
    %p143 = scmp.eq.s32.totalorder %s19, 0
    %p144 = por %p142, %p143
    %s145 = ssub.s32 %s20, %s32
    %s146 = ssub.s32 %s21, %s28
    %s147 = sor.u32 %s145, %s146
    %p148 = scmp.eq.s32.totalorder %s147, 0
    %s150 = sadd.s32 %s149, 1
    %s151 = scalar_select %p148, %s149, %s150
    %p154 = pneg %p148
    %p155 = scmp.eq.s32.totalorder %s13, 1
    %p156 = por %p154, %p155
    %p157 = scmp.ne.s32.totalorder %s149, %s152
    %p158 = scmp.eq.s32.totalorder %s13, 0
    %p159 = por %p157, %p158
    %p160 = scmp.ne.s32.totalorder %s149, %s152
    %p161 = scmp.eq.s32.totalorder %s18, 1
    %p162 = por %p160, %p161
    %p163 = scmp.ne.s32.totalorder %s152, %s153
    %p164 = scmp.eq.s32.totalorder %s18, 0
    %p165 = por %p163, %p164
    %p166 = scmp.ne.s32.totalorder %s152, %s153
    %p167 = scmp.eq.s32.totalorder %s19, 1
    %p168 = por %p166, %p167
    %p170 = scmp.ne.s32.totalorder %s153, %s169
    %p171 = scmp.eq.s32.totalorder %s19, 0
    %p172 = por %p170, %p171
    %s173 = ssub.s32 %s20, %s32
    %s174 = ssub.s32 %s21, %s28
    %s175 = sor.u32 %s173, %s174
    %p176 = scmp.eq.s32.totalorder %s175, 0
    %s178 = sadd.s32 %s177, 1
    %s179 = scalar_select %p176, %s177, %s178
    %p182 = pneg %p176
    %p183 = scmp.eq.s32.totalorder %s13, 1
    %p184 = por %p182, %p183
    %p185 = scmp.ne.s32.totalorder %s177, %s180
    %p186 = scmp.eq.s32.totalorder %s13, 0
    %p187 = por %p185, %p186
    %p188 = scmp.ne.s32.totalorder %s177, %s180
    %p189 = scmp.eq.s32.totalorder %s18, 1
    %p190 = por %p188, %p189
    %p191 = scmp.ne.s32.totalorder %s180, %s181
    %p192 = scmp.eq.s32.totalorder %s18, 0
    %p193 = por %p191, %p192
    %p194 = scmp.ne.s32.totalorder %s180, %s181
    %p195 = scmp.eq.s32.totalorder %s19, 1
    %p196 = por %p194, %p195
    %p198 = scmp.ne.s32.totalorder %s181, %s197
    %p199 = scmp.eq.s32.totalorder %s19, 0
    %p200 = por %p198, %p199
    %p201 = scmp.le.s32.totalorder 1, %s13
    %p202 = scmp.lt.s32.totalorder %s13, 3
    %p203 = pnand %p201, %p202
    %p204 = pneg %p203
    // Predicated region
    $region9: #{coatt_layer_forward.4} parent=5 // pred_check
      _
    $region10: #{coatt_layer_forward.4} parent=5 // pred_check_branch
      %206 = sbr.rel (%p203) target = $region12
    $region11: #{coatt_layer_forward.4} parent=5 // pred_region
      %s207 = ssub.s32 %s13, 1
      // Predicated region
      $region13: #{coatt_layer_forward.4} parent=11 // pred_check
        %p208 = pneg %p74
      $region14: #{coatt_layer_forward.4} parent=11 // pred_check_branch
        %210 = sbr.rel (%p208) target = $region16
      $region15: #{coatt_layer_forward.4} parent=11 // pred_region
        _
      $region16: #{coatt_layer_forward.4} parent=11 // pred_fallthru
        _
      // Predicated region
      $region17: #{coatt_layer_forward.4} parent=11 // pred_check
        %p211 = pneg %p95
      $region18: #{coatt_layer_forward.4} parent=11 // pred_check_branch
        %213 = sbr.rel (%p211) target = $region20
      $region19: #{coatt_layer_forward.4} parent=11 // pred_region
        _
      $region20: #{coatt_layer_forward.4} parent=11 // pred_fallthru
        _
      // Predicated region
      $region21: #{coatt_layer_forward.4} parent=11 // pred_check
        %p214 = pneg %p116
      $region22: #{coatt_layer_forward.4} parent=11 // pred_check_branch
        %216 = sbr.rel (%p214) target = $region24
      $region23: #{coatt_layer_forward.4} parent=11 // pred_region
        _
      $region24: #{coatt_layer_forward.4} parent=11 // pred_fallthru
        _
      // Predicated region
      $region25: #{coatt_layer_forward.4} parent=11 // pred_check
        %p217 = pneg %p137
      $region26: #{coatt_layer_forward.4} parent=11 // pred_check_branch
        %219 = sbr.rel (%p217) target = $region28
      $region27: #{coatt_layer_forward.4} parent=11 // pred_region
        _
      $region28: #{coatt_layer_forward.4} parent=11 // pred_fallthru
        _
    $region12: #{coatt_layer_forward.4} parent=5 // pred_fallthru
      _
    %p220 = scmp.lt.s32.totalorder %s13, 2
    // Predicated region
    $region29: #{coatt_layer_forward.4} parent=5 // pred_check
      %p221 = pneg %p220
    $region30: #{coatt_layer_forward.4} parent=5 // pred_check_branch
      %223 = sbr.rel (%p221) target = $region32
    $region31: #{coatt_layer_forward.4} parent=5 // pred_region
      // Predicated region
      $region33: #{coatt_layer_forward.4} parent=31 // pred_check
        %p224 = pneg %p47
      $region34: #{coatt_layer_forward.4} parent=31 // pred_check_branch
        %226 = sbr.rel (%p224) target = $region36
      $region35: #{coatt_layer_forward.4} parent=31 // pred_region
        %s227 = smul.u32 2, %s21
        %p228 = scmp.lt.s32.totalorder %s20, 1
        %s229 = scalar_select %p228, %s20, 1
        %p230 = scmp.lt.s32.totalorder %s227, 1
        %s231 = scalar_select %p230, %s227, 1
        %s232 = smul.addr %s229, 8
        %s233 = sadd.s32 %s231, %s232
        %s234 = smul.addr %s233, 8
        %s235 = scalar_lea.vmem %s0, %s234
        %s236 = smul.u32 2, %s21
      $region36: #{coatt_layer_forward.4} parent=31 // pred_fallthru
        _
    $region32: #{coatt_layer_forward.4} parent=5 // pred_fallthru
      _
    %p237 = scmp.le.s32.totalorder 1, %s13
    %p238 = scmp.lt.s32.totalorder %s13, 3
    %p239 = pnand %p237, %p238
    %p240 = pneg %p239
    // Predicated region
    $region37: #{coatt_layer_forward.4} parent=5 // pred_check
      _
    $region38: #{coatt_layer_forward.4} parent=5 // pred_check_branch
      %242 = sbr.rel (%p239) target = $region40
    $region39: #{coatt_layer_forward.4} parent=5 // pred_region
      %s243 = ssub.s32 %s13, 1
      %s244 = smul.u32 2, %s23
      %p245 = scmp.lt.s32.totalorder %s22, 1
      %s246 = scalar_select %p245, %s22, 1
      %p247 = scmp.lt.s32.totalorder %s244, 1
      %s248 = scalar_select %p247, %s244, 1
      %s249 = smul.addr %s246, 8
      %s250 = sadd.s32 %s248, %s249
      %s251 = smul.addr %s250, 8
      %s252 = scalar_lea.vmem %s0, %s251
      %p253 = pneg %p53
      %p254 = pneg %p50
      %p255 = pneg %p74
      %p256 = pneg %p71
      %p257 = pneg %p95
      %p258 = pneg %p92
      %p259 = pneg %p116
      %p260 = pneg %p113
      %p261 = pneg %p137
      %p262 = pneg %p134
      %p263 = pneg %p165
      %p264 = pneg %p162
      %s265 = smul.u32 2, %s23
      %p266 = scmp.lt.s32.totalorder %s22, 1
      %s267 = scalar_select %p266, %s22, 1
      %p268 = scmp.lt.s32.totalorder %s265, 1
      %s269 = scalar_select %p268, %s265, 1
      %s270 = smul.addr %s267, 8
      %s271 = sadd.s32 %s269, %s270
      %s272 = smul.addr %s271, 4
      %s273 = scalar_lea.vmem %s5, %s272
      %p274 = pneg %p193
      %p275 = pneg %p190
      %s276 = smul.u32 2, %s23
      %p277 = scmp.lt.s32.totalorder %s22, 1
      %s278 = scalar_select %p277, %s22, 1
      %p279 = scmp.lt.s32.totalorder %s276, 1
      %s280 = scalar_select %p279, %s276, 1
      %s281 = smul.addr %s278, 8
      %s282 = sadd.s32 %s280, %s281
      %s283 = smul.addr %s282, 4
      %s284 = scalar_lea.vmem %s6, %s283
      %s285 = smul.u32 2, %s23
      %p286 = scmp.lt.s32.totalorder %s22, 1
      %s287 = scalar_select %p286, %s22, 1
      %p288 = scmp.lt.s32.totalorder %s285, 1
      %s289 = scalar_select %p288, %s285, 1
      %s290 = smul.addr %s287, 8
      %s291 = sadd.s32 %s289, %s290
      %s292 = smul.addr %s291, 8
      %s293 = scalar_lea.vmem %s0, %s292
      %s294 = smul.u32 2, %s23
      %s295 = smul.u32 2, %s23
      %p296 = scmp.lt.s32.totalorder %s22, 1
      %s297 = scalar_select %p296, %s22, 1
      %p298 = scmp.lt.s32.totalorder %s295, 1
      %s299 = scalar_select %p298, %s295, 1
      %s300 = smul.addr %s297, 8
      %s301 = sadd.s32 %s299, %s300
      %s302 = smul.addr %s301, 4
      %s303 = scalar_lea.vmem %s5, %s302
      %s304 = smul.u32 2, %s23
      %s305 = smul.u32 2, %s23
      %p306 = scmp.lt.s32.totalorder %s22, 1
      %s307 = scalar_select %p306, %s22, 1
      %p308 = scmp.lt.s32.totalorder %s305, 1
      %s309 = scalar_select %p308, %s305, 1
      %s310 = smul.addr %s307, 8
      %s311 = sadd.s32 %s309, %s310
      %s312 = smul.addr %s311, 4
      %s313 = scalar_lea.vmem %s6, %s312
      %s314 = smul.u32 2, %s23
      %v316 = vld [vmem:[%s293] sm:$0xff]
      %v317 = vld [vmem:[%s293 + $0x8] sm:$0xff]
      %v318 = vld [vmem:[%s293 + $0x10] sm:$0xff]
      %v319 = vld [vmem:[%s293 + $0x18] sm:$0xff]
      %v320 = vld [vmem:[%s293 + $0x20] sm:$0xff]
      %v321 = vld [vmem:[%s293 + $0x28] sm:$0xff]
      %v322 = vld [vmem:[%s293 + $0x30] sm:$0xff]
      %v323 = vld [vmem:[%s293 + $0x38] sm:$0xff]
      %v324 = vpack.c.bf16 %v318, %v316
      %v325 = vpack.c.bf16 %v319, %v317
      %v326 = vpack.c.bf16 %v322, %v320
      %v327 = vpack.c.bf16 %v323, %v321
      %v328 = vld [vmem:[%s1] sm:$0xf]
      %v329 = vld [vmem:[%s1 + $0x4] sm:$0xf]
      %v330 = vld [vmem:[%s1 + $0x8] sm:$0xf]
      %v331 = vld [vmem:[%s1 + $0xc] sm:$0xf]
      %v332 = vld [vmem:[%s2] sm:$0xff]
      %v333 = vld [vmem:[%s2 + $0x8] sm:$0xff]
      %v334 = vld [vmem:[%s2 + $0x10] sm:$0xff]
      %v335 = vld [vmem:[%s2 + $0x18] sm:$0xff]
      %337 = vset.pattern.permute.xlu0 0
      %338 = vperm.xlu0 %337, %v332
      %v339 = vpop.permute.xlu0 %338
      %342 = vset.pattern.permute.xlu0 0
      %343 = vperm.xlu0 %342, %v333
      %v344 = vpop.permute.xlu0 %343
      %347 = vset.pattern.permute.xlu0 0
      %348 = vperm.xlu0 %347, %v334
      %v349 = vpop.permute.xlu0 %348
      %352 = vset.pattern.permute.xlu0 0
      %353 = vperm.xlu0 %352, %v335
      %v354 = vpop.permute.xlu0 %353
      %v360 = vunpack.c.l.b16 %v328
      %v361 = vunpack.c.l.b16 %v329
      %v362 = vunpack.c.l.b16 %v330
      %v363 = vunpack.c.l.b16 %v331
      %v364 = vpack.c.b16 %v361, %v360
      %v365 = vpack.c.b16 %v363, %v362
      %vm366 = vcmask 261120
      %v368 = vsel %vm366, %v364, 0
      %v371 = vsel %vm366, %v365, 0
      %373 = vmatprep.subr.bf16.mxu0 %v325
      %374 = vmatpush1.bf16.msra.mxu0 %v324
      %375 = vmatprep.subr.bf16.mxu0 %v327
      %376 = vmatpush1.bf16.msra.mxu0 %v326
      %377 = vmatprep.subr.bf16.mxu0 0
      %378 = vmatpush1.bf16.msra.mxu0 0
      %379 = vmatprep.subr.bf16.mxu0 0
      %380 = vmatpush1.bf16.msra.mxu0 0
      %381 = vmatprep.subr.bf16.mxu0 0
      %382 = vmatpush1.bf16.msra.mxu0 0
      %383 = vmatprep.subr.bf16.mxu0 0
      %384 = vmatpush1.bf16.msra.mxu0 0
      %385 = vmatprep.subr.bf16.mxu0 0
      %386 = vmatpush1.bf16.msra.mxu0 0
      %387 = vmatprep.subr.bf16.mxu0 0
      %388 = vmatpush1.bf16.msra.mxu0 0
      %389 = vmatprep.subr.bf16.mxu0 0
      %390 = vmatpush1.bf16.msra.mxu0 0
      %391 = vmatprep.subr.bf16.mxu0 0
      %392 = vmatpush1.bf16.msra.mxu0 0
      %393 = vmatprep.subr.bf16.mxu0 0
      %394 = vmatpush1.bf16.msra.mxu0 0
      %395 = vmatprep.subr.bf16.mxu0 0
      %396 = vmatpush1.bf16.msra.mxu0 0
      %397 = vmatprep.subr.bf16.mxu0 0
      %398 = vmatpush1.bf16.msra.mxu0 0
      %399 = vmatprep.subr.bf16.mxu0 0
      %400 = vmatpush1.bf16.msra.mxu0 0
      %401 = vmatprep.subr.bf16.mxu0 0
      %402 = vmatpush1.bf16.msra.mxu0 0
      %403 = vmatprep.subr.bf16.mxu0 0
      %404 = vmatpush1.bf16.msra.mxu0 0
      %405 = vmatprep.mubr.bf16.mxu0 0
      %406 = vmatmul.mubr.bf16.gmra.mrb[0].mxu0 %v368
      %v407 = vpop.f32.mrb[0].mxu0
      %v408 = vadd.f32 %v339, %v407
      %v409 = vpop.f32.mrb[0].mxu0
      %v410 = vadd.f32 %v339, %v409
      %v411 = vpop.f32.mrb[0].mxu0
      %v412 = vadd.f32 %v344, %v411
      %v413 = vpop.f32.mrb[0].mxu0
      %v414 = vadd.f32 %v344, %v413
      %415 = vmatprep.mubr.bf16.mxu0 0
      %416 = vmatmul.mubr.bf16.gmra.mrb[0].mxu0 %v371
      %v417 = vpop.f32.mrb[0].mxu0
      %v418 = vadd.f32 %v349, %v417
      %v419 = vpop.f32.mrb[0].mxu0
      %v420 = vadd.f32 %v349, %v419
      %v421 = vpop.f32.mrb[0].mxu0
      %v422 = vadd.f32 %v354, %v421
      %v423 = vpop.f32.mrb[0].mxu0
      %v424 = vadd.f32 %v354, %v423
      %425 = vdwg.mxu0
      %v426 = vld [vmem:[%s3] sm:$0xf]
      %v427 = vld [vmem:[%s3 + $0x4] sm:$0xf]
      %v428 = vld [vmem:[%s3 + $0x8] sm:$0xf]
      %v429 = vld [vmem:[%s3 + $0xc] sm:$0xf]
      %v430 = vld [vmem:[%s4] sm:$0xff]
      %v431 = vld [vmem:[%s4 + $0x8] sm:$0xff]
      %v432 = vld [vmem:[%s4 + $0x10] sm:$0xff]
      %v433 = vld [vmem:[%s4 + $0x18] sm:$0xff]
      %435 = vset.pattern.permute.xlu0 0
      %436 = vperm.xlu0 %435, %v430
      %v437 = vpop.permute.xlu0 %436
      %440 = vset.pattern.permute.xlu0 0
      %441 = vperm.xlu0 %440, %v431
      %v442 = vpop.permute.xlu0 %441
      %445 = vset.pattern.permute.xlu0 0
      %446 = vperm.xlu0 %445, %v432
      %v447 = vpop.permute.xlu0 %446
      %450 = vset.pattern.permute.xlu0 0
      %451 = vperm.xlu0 %450, %v433
      %v452 = vpop.permute.xlu0 %451
      %v458 = vunpack.c.l.b16 %v426
      %v459 = vunpack.c.l.b16 %v427
      %v460 = vunpack.c.l.b16 %v428
      %v461 = vunpack.c.l.b16 %v429
      %v462 = vpack.c.b16 %v459, %v458
      %v463 = vpack.c.b16 %v461, %v460
      %v465 = vsel %vm366, %v462, 0
      %v468 = vsel %vm366, %v463, 0
      %470 = vmatprep.subr.bf16.mxu0 %v325
      %471 = vmatpush1.bf16.msra.mxu0 %v324
      %472 = vmatprep.subr.bf16.mxu0 %v327
      %473 = vmatpush1.bf16.msra.mxu0 %v326
      %474 = vmatprep.subr.bf16.mxu0 0
      %475 = vmatpush1.bf16.msra.mxu0 0
      %476 = vmatprep.subr.bf16.mxu0 0
      %477 = vmatpush1.bf16.msra.mxu0 0
      %478 = vmatprep.subr.bf16.mxu0 0
      %479 = vmatpush1.bf16.msra.mxu0 0
      %480 = vmatprep.subr.bf16.mxu0 0
      %481 = vmatpush1.bf16.msra.mxu0 0
      %482 = vmatprep.subr.bf16.mxu0 0
      %483 = vmatpush1.bf16.msra.mxu0 0
      %484 = vmatprep.subr.bf16.mxu0 0
      %485 = vmatpush1.bf16.msra.mxu0 0
      %486 = vmatprep.subr.bf16.mxu0 0
      %487 = vmatpush1.bf16.msra.mxu0 0
      %488 = vmatprep.subr.bf16.mxu0 0
      %489 = vmatpush1.bf16.msra.mxu0 0
      %490 = vmatprep.subr.bf16.mxu0 0
      %491 = vmatpush1.bf16.msra.mxu0 0
      %492 = vmatprep.subr.bf16.mxu0 0
      %493 = vmatpush1.bf16.msra.mxu0 0
      %494 = vmatprep.subr.bf16.mxu0 0
      %495 = vmatpush1.bf16.msra.mxu0 0
      %496 = vmatprep.subr.bf16.mxu0 0
      %497 = vmatpush1.bf16.msra.mxu0 0
      %498 = vmatprep.subr.bf16.mxu0 0
      %499 = vmatpush1.bf16.msra.mxu0 0
      %500 = vmatprep.subr.bf16.mxu0 0
      %501 = vmatpush1.bf16.msra.mxu0 0
      %502 = vmatprep.mubr.bf16.mxu0 0
      %503 = vmatmul.mubr.bf16.gmra.mrb[0].mxu0 %v465
      %v504 = vpop.f32.mrb[0].mxu0
      %v505 = vadd.f32 %v437, %v504
      %v506 = vpop.f32.mrb[0].mxu0
      %v507 = vadd.f32 %v437, %v506
      %v508 = vpop.f32.mrb[0].mxu0
      %v509 = vadd.f32 %v442, %v508
      %v510 = vpop.f32.mrb[0].mxu0
      %v511 = vadd.f32 %v442, %v510
      %512 = vmatprep.mubr.bf16.mxu0 0
      %513 = vmatmul.mubr.bf16.gmra.mrb[0].mxu0 %v468
      %v514 = vpop.f32.mrb[0].mxu0
      %v515 = vadd.f32 %v447, %v514
      %v516 = vpop.f32.mrb[0].mxu0
      %v517 = vadd.f32 %v447, %v516
      %v518 = vpop.f32.mrb[0].mxu0
      %v519 = vadd.f32 %v452, %v518
      %v520 = vpop.f32.mrb[0].mxu0
      %v521 = vadd.f32 %v452, %v520
      %522 = vdwg.mxu0
      %v523 = vpack.c.bf16 %v412, %v408
      %v524 = vpack.c.bf16 %v414, %v410
      %v525 = vpack.c.bf16 %v422, %v418
      %v526 = vpack.c.bf16 %v424, %v420
      %v531 = vunpack.c.l.b16 %v523
      %v532 = vunpack.c.l.b16 %v524
      %v533 = vunpack.c.h.b16 %v523
      %v534 = vunpack.c.h.b16 %v524
      %v535 = vunpack.c.l.b16 %v525
      %v536 = vunpack.c.l.b16 %v526
      %v537 = vunpack.c.h.b16 %v525
      %v538 = vunpack.c.h.b16 %v526
      %v539 = vpack.c.b16 %v532, %v531
      %v540 = vpack.c.b16 %v534, %v533
      %v541 = vpack.c.b16 %v536, %v535
      %v542 = vpack.c.b16 %v538, %v537
      %547 = vst [vmem:[%s303] sm:$0xff] %v539
      %548 = vst [vmem:[%s303 + $0x8] sm:$0xff] %v540
      %549 = vst [vmem:[%s303 + $0x10] sm:$0xff] %v541
      %550 = vst [vmem:[%s303 + $0x18] sm:$0xff] %v542
      %v551 = vpack.c.bf16 %v509, %v505
      %v552 = vpack.c.bf16 %v511, %v507
      %v553 = vpack.c.bf16 %v519, %v515
      %v554 = vpack.c.bf16 %v521, %v517
      %v559 = vunpack.c.l.b16 %v551
      %v560 = vunpack.c.l.b16 %v552
      %v561 = vunpack.c.h.b16 %v551
      %v562 = vunpack.c.h.b16 %v552
      %v563 = vunpack.c.l.b16 %v553
      %v564 = vunpack.c.l.b16 %v554
      %v565 = vunpack.c.h.b16 %v553
      %v566 = vunpack.c.h.b16 %v554
      %v567 = vpack.c.b16 %v560, %v559
      %v568 = vpack.c.b16 %v562, %v561
      %v569 = vpack.c.b16 %v564, %v563
      %v570 = vpack.c.b16 %v566, %v565
      %575 = vst [vmem:[%s313] sm:$0xff] %v567
      %576 = vst [vmem:[%s313 + $0x8] sm:$0xff] %v568
      %577 = vst [vmem:[%s313 + $0x10] sm:$0xff] %v569
      %578 = vst [vmem:[%s313 + $0x18] sm:$0xff] %v570
      %s579 = smul.u32 2, %s23
      %p580 = scmp.lt.s32.totalorder %s22, 1
      %s581 = scalar_select %p580, %s22, 1
      %p582 = scmp.lt.s32.totalorder %s579, 1
      %s583 = scalar_select %p582, %s579, 1
      %s584 = smul.addr %s581, 8
      %s585 = sadd.s32 %s583, %s584
      %s586 = smul.addr %s585, 4
      %s587 = scalar_lea.vmem %s5, %s586
      %s588 = smul.u32 2, %s23
      %p589 = scmp.lt.s32.totalorder %s22, 1
      %s590 = scalar_select %p589, %s22, 1
      %p591 = scmp.lt.s32.totalorder %s588, 1
      %s592 = scalar_select %p591, %s588, 1
      %s593 = smul.addr %s590, 8
      %s594 = sadd.s32 %s592, %s593
      %s595 = smul.addr %s594, 4
      %s596 = scalar_lea.vmem %s6, %s595
      // Predicated region
      $region41: #{coatt_layer_forward.4} parent=39 // pred_check
        %p597 = pneg %p162
      $region42: #{coatt_layer_forward.4} parent=39 // pred_check_branch
        %599 = sbr.rel (%p597) target = $region44
      $region43: #{coatt_layer_forward.4} parent=39 // pred_region
        %s600 = smul.u32 2, %s23
      $region44: #{coatt_layer_forward.4} parent=39 // pred_fallthru
        _
      // Predicated region
      $region45: #{coatt_layer_forward.4} parent=39 // pred_check
        %p601 = pneg %p190
      $region46: #{coatt_layer_forward.4} parent=39 // pred_check_branch
        %603 = sbr.rel (%p601) target = $region48
      $region47: #{coatt_layer_forward.4} parent=39 // pred_region
        %s604 = smul.u32 2, %s23
      $region48: #{coatt_layer_forward.4} parent=39 // pred_fallthru
        _
    $region40: #{coatt_layer_forward.4} parent=5 // pred_fallthru
      _
    %p605 = scmp.le.s32.totalorder 2, %s13
    // Predicated region
    $region49: #{coatt_layer_forward.4} parent=5 // pred_check
      %p606 = pneg %p605
    $region50: #{coatt_layer_forward.4} parent=5 // pred_check_branch
      %608 = sbr.rel (%p606) target = $region52
    $region51: #{coatt_layer_forward.4} parent=5 // pred_region
      %s609 = ssub.s32 %s13, 2
      // Predicated region
      $region53: #{coatt_layer_forward.4} parent=51 // pred_check
        %p610 = pneg %p168
      $region54: #{coatt_layer_forward.4} parent=51 // pred_check_branch
        %612 = sbr.rel (%p610) target = $region56
      $region55: #{coatt_layer_forward.4} parent=51 // pred_region
        %s613 = smul.u32 2, %s25
        %p614 = scmp.lt.s32.totalorder %s24, 1
        %s615 = scalar_select %p614, %s24, 1
        %p616 = scmp.lt.s32.totalorder %s613, 1
        %s617 = scalar_select %p616, %s613, 1
        %s618 = smul.addr %s615, 8
        %s619 = sadd.s32 %s617, %s618
        %s620 = smul.addr %s619, 4
        %s621 = scalar_lea.vmem %s5, %s620
      $region56: #{coatt_layer_forward.4} parent=51 // pred_fallthru
        _
      // Predicated region
      $region57: #{coatt_layer_forward.4} parent=51 // pred_check
        %p622 = pneg %p196
      $region58: #{coatt_layer_forward.4} parent=51 // pred_check_branch
        %624 = sbr.rel (%p622) target = $region60
      $region59: #{coatt_layer_forward.4} parent=51 // pred_region
        %s625 = smul.u32 2, %s25
        %p626 = scmp.lt.s32.totalorder %s24, 1
        %s627 = scalar_select %p626, %s24, 1
        %p628 = scmp.lt.s32.totalorder %s625, 1
        %s629 = scalar_select %p628, %s625, 1
        %s630 = smul.addr %s627, 8
        %s631 = sadd.s32 %s629, %s630
        %s632 = smul.addr %s631, 4
        %s633 = scalar_lea.vmem %s6, %s632
      $region60: #{coatt_layer_forward.4} parent=51 // pred_fallthru
        _
    $region52: #{coatt_layer_forward.4} parent=5 // pred_fallthru
      _
  $region6: #{coatt_layer_forward.4} parent=0 // loop_footer
    %s17 = sadd.s32 1, %s13
  $region7: #{coatt_layer_forward.4} parent=0 // loop_footer_branch
    %12 = sbr.rel target = $region3
  $region8: #{coatt_layer_forward.4} parent=0 // loop_exit
    _

// kernel: coatt_layer_forward.7
$region0: #{coatt_layer_forward.7}
  #allocation0 [shape = 'u32[]', space=smem, size = 0x4, offset = 0x4, fixed_abs, tag = 'smem constant byte address 0x4 - core index']
  #allocation1 [shape = 'u32[144,128]{1,0:T(1,128)}', space=vmem, size = 0x12000, scoped, tag = 'internal scratch']
  %s0 = inlined_call_operand.vmem [shape: f32[2,32,256], index: 0, kind: input, shape index: {}]
  %s1 = inlined_call_operand.vmem [shape: f32[32,1], index: 1, kind: input, shape index: {}]
  %s2 = inlined_call_operand.vmem [shape: f32[2,32,256], index: 2, kind: output, shape index: {}]
  %s3 = sld [smem:[#allocation0]]
  $region41: #{coatt_layer_forward.7} parent=0
    _
  %s5 = ssub.s32 1, %s3
  %s6 = scalar_select 0, %s5, %s3
  loop: start=0, step=1, limit=4
  $region2: #{coatt_layer_forward.7} parent=0 // loop_pre_header
    _
  $region3: #{coatt_layer_forward.7} parent=0 // loop_header
    %s8 = sphi 0, %s12
    %p9 = scmp.ge.s32.totalorder %s8, 4
    %s15 = sphi 0, %s27
    %s16 = sphi 0, %s23
    %s17 = sphi 0, %s15
    %s18 = sphi 0, %s16
    %s19 = sphi 0, %s17
    %s20 = sphi 0, %s18
    %s32 = sphi 0, %s34
    %s35 = sphi 0, %s32
    %s36 = sphi 0, %s35
    %s52 = sphi 0, %s36
    %s56 = sphi 0, %s56
    %s58 = sphi 0, %s56
    %s59 = sphi 0, %s58
    %s73 = sphi 0, %s59
    %s81 = sphi 0, %s83
    %s84 = sphi 0, %s81
    %s85 = sphi 0, %s84
    %s101 = sphi 0, %s85
  $region4: #{coatt_layer_forward.7} parent=0 // loop_header_branch
    %11 = sbr.rel (%p9) target = $region8
  $region5: #{coatt_layer_forward.7} parent=0 // loop_body
    %s13 = ssub.s32 %s8, 1
    %s14 = ssub.s32 %s8, 2
    %s21 = sadd.s32 1, %s16
    %p22 = scmp.ge.s32.totalorder %s21, 1
    %s23 = scalar_select %p22, 0, %s21
    %s24 = sadd.s32 1, %s15
    %s25 = scalar_select %p22, %s24, %s15
    %p26 = scmp.ge.s32.totalorder %s25, 2
    %s27 = scalar_select %p26, 0, %s25
    %s28 = ssub.s32 %s15, %s27
    %s29 = ssub.s32 %s16, %s23
    %s30 = sor.u32 %s28, %s29
    %p31 = scmp.eq.s32.totalorder %s30, 0
    %s33 = sadd.s32 %s32, 1
    %s34 = scalar_select %p31, %s32, %s33
    %p37 = pneg %p31
    %p38 = scmp.eq.s32.totalorder %s8, 1
    %p39 = por %p37, %p38
    %p40 = scmp.ne.s32.totalorder %s32, %s35
    %p41 = scmp.eq.s32.totalorder %s8, 0
    %p42 = por %p40, %p41
    %p43 = scmp.ne.s32.totalorder %s32, %s35
    %p44 = scmp.eq.s32.totalorder %s13, 1
    %p45 = por %p43, %p44
    %p46 = scmp.ne.s32.totalorder %s35, %s36
    %p47 = scmp.eq.s32.totalorder %s13, 0
    %p48 = por %p46, %p47
    %p49 = scmp.ne.s32.totalorder %s35, %s36
    %p50 = scmp.eq.s32.totalorder %s14, 1
    %p51 = por %p49, %p50
    %p53 = scmp.ne.s32.totalorder %s36, %s52
    %p54 = scmp.eq.s32.totalorder %s14, 0
    %p55 = por %p53, %p54
    %s57 = sadd.s32 %s56, 1
    %p60 = scmp.eq.s32.totalorder %s8, 1
    %p61 = scmp.ne.s32.totalorder %s56, %s58
    %p62 = scmp.eq.s32.totalorder %s8, 0
    %p63 = por %p61, %p62
    %p64 = scmp.ne.s32.totalorder %s56, %s58
    %p65 = scmp.eq.s32.totalorder %s13, 1
    %p66 = por %p64, %p65
    %p67 = scmp.ne.s32.totalorder %s58, %s59
    %p68 = scmp.eq.s32.totalorder %s13, 0
    %p69 = por %p67, %p68
    %p70 = scmp.ne.s32.totalorder %s58, %s59
    %p71 = scmp.eq.s32.totalorder %s14, 1
    %p72 = por %p70, %p71
    %p74 = scmp.ne.s32.totalorder %s59, %s73
    %p75 = scmp.eq.s32.totalorder %s14, 0
    %p76 = por %p74, %p75
    %s77 = ssub.s32 %s15, %s27
    %s78 = ssub.s32 %s16, %s23
    %s79 = sor.u32 %s77, %s78
    %p80 = scmp.eq.s32.totalorder %s79, 0
    %s82 = sadd.s32 %s81, 1
    %s83 = scalar_select %p80, %s81, %s82
    %p86 = pneg %p80
    %p87 = scmp.eq.s32.totalorder %s8, 1
    %p88 = por %p86, %p87
    %p89 = scmp.ne.s32.totalorder %s81, %s84
    %p90 = scmp.eq.s32.totalorder %s8, 0
    %p91 = por %p89, %p90
    %p92 = scmp.ne.s32.totalorder %s81, %s84
    %p93 = scmp.eq.s32.totalorder %s13, 1
    %p94 = por %p92, %p93
    %p95 = scmp.ne.s32.totalorder %s84, %s85
    %p96 = scmp.eq.s32.totalorder %s13, 0
    %p97 = por %p95, %p96
    %p98 = scmp.ne.s32.totalorder %s84, %s85
    %p99 = scmp.eq.s32.totalorder %s14, 1
    %p100 = por %p98, %p99
    %p102 = scmp.ne.s32.totalorder %s85, %s101
    %p103 = scmp.eq.s32.totalorder %s14, 0
    %p104 = por %p102, %p103
    %p105 = scmp.le.s32.totalorder 1, %s8
    %p106 = scmp.lt.s32.totalorder %s8, 3
    %p107 = pnand %p105, %p106
    %p108 = pneg %p107
    // Predicated region
    $region9: #{coatt_layer_forward.7} parent=5 // pred_check
      _
    $region10: #{coatt_layer_forward.7} parent=5 // pred_check_branch
      %110 = sbr.rel (%p107) target = $region12
    $region11: #{coatt_layer_forward.7} parent=5 // pred_region
      %s111 = ssub.s32 %s8, 1
      // Predicated region
      $region13: #{coatt_layer_forward.7} parent=11 // pred_check
        %p112 = pneg %p69
      $region14: #{coatt_layer_forward.7} parent=11 // pred_check_branch
        %114 = sbr.rel (%p112) target = $region16
      $region15: #{coatt_layer_forward.7} parent=11 // pred_region
        _
      $region16: #{coatt_layer_forward.7} parent=11 // pred_fallthru
        _
    $region12: #{coatt_layer_forward.7} parent=5 // pred_fallthru
      _
    %p115 = scmp.lt.s32.totalorder %s8, 2
    // Predicated region
    $region17: #{coatt_layer_forward.7} parent=5 // pred_check
      %p116 = pneg %p115
    $region18: #{coatt_layer_forward.7} parent=5 // pred_check_branch
      %118 = sbr.rel (%p116) target = $region20
    $region19: #{coatt_layer_forward.7} parent=5 // pred_region
      // Predicated region
      $region21: #{coatt_layer_forward.7} parent=19 // pred_check
        %p119 = pneg %p42
      $region22: #{coatt_layer_forward.7} parent=19 // pred_check_branch
        %121 = sbr.rel (%p119) target = $region24
      $region23: #{coatt_layer_forward.7} parent=19 // pred_region
        %s122 = smul.u32 2, %s16
        %p123 = scmp.lt.s32.totalorder %s15, 1
        %s124 = scalar_select %p123, %s15, 1
        %p125 = scmp.lt.s32.totalorder %s122, 1
        %s126 = scalar_select %p125, %s122, 1
        %s127 = smul.addr %s124, 8
        %s128 = sadd.s32 %s126, %s127
        %s129 = smul.addr %s128, 8
        %s130 = scalar_lea.vmem %s0, %s129
        %s131 = smul.u32 2, %s16
      $region24: #{coatt_layer_forward.7} parent=19 // pred_fallthru
        _
    $region20: #{coatt_layer_forward.7} parent=5 // pred_fallthru
      _
    %p132 = scmp.le.s32.totalorder 1, %s8
    %p133 = scmp.lt.s32.totalorder %s8, 3
    %p134 = pnand %p132, %p133
    %p135 = pneg %p134
    // Predicated region
    $region25: #{coatt_layer_forward.7} parent=5 // pred_check
      _
    $region26: #{coatt_layer_forward.7} parent=5 // pred_check_branch
      %137 = sbr.rel (%p134) target = $region28
    $region27: #{coatt_layer_forward.7} parent=5 // pred_region
      %s138 = ssub.s32 %s8, 1
      %s139 = smul.u32 2, %s18
      %p140 = scmp.lt.s32.totalorder %s17, 1
      %s141 = scalar_select %p140, %s17, 1
      %p142 = scmp.lt.s32.totalorder %s139, 1
      %s143 = scalar_select %p142, %s139, 1
      %s144 = smul.addr %s141, 8
      %s145 = sadd.s32 %s143, %s144
      %s146 = smul.addr %s145, 8
      %s147 = scalar_lea.vmem %s0, %s146
      %p148 = pneg %p48
      %p149 = pneg %p45
      %p150 = pneg %p69
      %p151 = pneg %p66
      %p152 = pneg %p97
      %p153 = pneg %p94
      %s154 = smul.u32 2, %s18
      %p155 = scmp.lt.s32.totalorder %s17, 1
      %s156 = scalar_select %p155, %s17, 1
      %p157 = scmp.lt.s32.totalorder %s154, 1
      %s158 = scalar_select %p157, %s154, 1
      %s159 = smul.addr %s156, 8
      %s160 = sadd.s32 %s158, %s159
      %s161 = smul.addr %s160, 8
      %s162 = scalar_lea.vmem %s2, %s161
      %s163 = smul.u32 2, %s18
      %p164 = scmp.lt.s32.totalorder %s17, 1
      %s165 = scalar_select %p164, %s17, 1
      %p166 = scmp.lt.s32.totalorder %s163, 1
      %s167 = scalar_select %p166, %s163, 1
      %s168 = smul.addr %s165, 8
      %s169 = sadd.s32 %s167, %s168
      %s170 = smul.addr %s169, 8
      %s171 = scalar_lea.vmem %s0, %s170
      %s172 = smul.u32 2, %s18
      %s173 = smul.u32 2, %s18
      %p174 = scmp.lt.s32.totalorder %s17, 1
      %s175 = scalar_select %p174, %s17, 1
      %p176 = scmp.lt.s32.totalorder %s173, 1
      %s177 = scalar_select %p176, %s173, 1
      %s178 = smul.addr %s175, 8
      %s179 = sadd.s32 %s177, %s178
      %s180 = smul.addr %s179, 8
      %s181 = scalar_lea.vmem %s2, %s180
      %s182 = smul.u32 2, %s18
      %v183 = vld [vmem:[%s171] sm:$0xff]
      %v184 = vld [vmem:[%s171 + $0x8] sm:$0xff]
      %v185 = vld [vmem:[%s171 + $0x10] sm:$0xff]
      %v186 = vld [vmem:[%s171 + $0x18] sm:$0xff]
      %v187 = vld [vmem:[%s171 + $0x20] sm:$0xff]
      %v188 = vld [vmem:[%s171 + $0x28] sm:$0xff]
      %v189 = vld [vmem:[%s171 + $0x30] sm:$0xff]
      %v190 = vld [vmem:[%s171 + $0x38] sm:$0xff]
      %v191 = vld [vmem:[%s1] sm:$0xff]
      %v192 = vld [vmem:[%s1 + $0x8] sm:$0xff]
      %v193 = vld [vmem:[%s1 + $0x10] sm:$0xff]
      %v194 = vld [vmem:[%s1 + $0x18] sm:$0xff]
      %196 = vset.pattern.permute.xlu0 0
      %197 = vperm.xlu0 %196, %v191
      %v198 = vpop.permute.xlu0 %197
      %201 = vset.pattern.permute.xlu0 0
      %202 = vperm.xlu0 %201, %v192
      %v203 = vpop.permute.xlu0 %202
      %206 = vset.pattern.permute.xlu0 0
      %207 = vperm.xlu0 %206, %v193
      %v208 = vpop.permute.xlu0 %207
      %211 = vset.pattern.permute.xlu0 0
      %212 = vperm.xlu0 %211, %v194
      %v213 = vpop.permute.xlu0 %212
      %v215 = vmul.f32 %v183, %v198
      %v216 = vmul.f32 %v184, %v198
      %v217 = vmul.f32 %v185, %v203
      %v218 = vmul.f32 %v186, %v203
      %v219 = vmul.f32 %v187, %v208
      %v220 = vmul.f32 %v188, %v208
      %v221 = vmul.f32 %v189, %v213
      %v222 = vmul.f32 %v190, %v213
      %223 = vst [vmem:[%s181] sm:$0xff] %v215
      %224 = vst [vmem:[%s181 + $0x8] sm:$0xff] %v216
      %225 = vst [vmem:[%s181 + $0x10] sm:$0xff] %v217
      %226 = vst [vmem:[%s181 + $0x18] sm:$0xff] %v218
      %227 = vst [vmem:[%s181 + $0x20] sm:$0xff] %v219
      %228 = vst [vmem:[%s181 + $0x28] sm:$0xff] %v220
      %229 = vst [vmem:[%s181 + $0x30] sm:$0xff] %v221
      %230 = vst [vmem:[%s181 + $0x38] sm:$0xff] %v222
      %s231 = smul.u32 2, %s18
      %p232 = scmp.lt.s32.totalorder %s17, 1
      %s233 = scalar_select %p232, %s17, 1
      %p234 = scmp.lt.s32.totalorder %s231, 1
      %s235 = scalar_select %p234, %s231, 1
      %s236 = smul.addr %s233, 8
      %s237 = sadd.s32 %s235, %s236
      %s238 = smul.addr %s237, 8
      %s239 = scalar_lea.vmem %s2, %s238
      // Predicated region
      $region29: #{coatt_layer_forward.7} parent=27 // pred_check
        %p240 = pneg %p94
      $region30: #{coatt_layer_forward.7} parent=27 // pred_check_branch
        %242 = sbr.rel (%p240) target = $region32
      $region31: #{coatt_layer_forward.7} parent=27 // pred_region
        %s243 = smul.u32 2, %s18
      $region32: #{coatt_layer_forward.7} parent=27 // pred_fallthru
        _
    $region28: #{coatt_layer_forward.7} parent=5 // pred_fallthru
      _
    %p244 = scmp.le.s32.totalorder 2, %s8
    // Predicated region
    $region33: #{coatt_layer_forward.7} parent=5 // pred_check
      %p245 = pneg %p244
    $region34: #{coatt_layer_forward.7} parent=5 // pred_check_branch
      %247 = sbr.rel (%p245) target = $region36
    $region35: #{coatt_layer_forward.7} parent=5 // pred_region
      %s248 = ssub.s32 %s8, 2
      // Predicated region
      $region37: #{coatt_layer_forward.7} parent=35 // pred_check
        %p249 = pneg %p100
      $region38: #{coatt_layer_forward.7} parent=35 // pred_check_branch
        %251 = sbr.rel (%p249) target = $region40
      $region39: #{coatt_layer_forward.7} parent=35 // pred_region
        %s252 = smul.u32 2, %s20
        %p253 = scmp.lt.s32.totalorder %s19, 1
        %s254 = scalar_select %p253, %s19, 1
        %p255 = scmp.lt.s32.totalorder %s252, 1
        %s256 = scalar_select %p255, %s252, 1
        %s257 = smul.addr %s254, 8
        %s258 = sadd.s32 %s256, %s257
        %s259 = smul.addr %s258, 8
        %s260 = scalar_lea.vmem %s2, %s259
      $region40: #{coatt_layer_forward.7} parent=35 // pred_fallthru
        _
    $region36: #{coatt_layer_forward.7} parent=5 // pred_fallthru
      _
  $region6: #{coatt_layer_forward.7} parent=0 // loop_footer
    %s12 = sadd.s32 1, %s8
  $region7: #{coatt_layer_forward.7} parent=0 // loop_footer_branch
    %7 = sbr.rel target = $region3
  $region8: #{coatt_layer_forward.7} parent=0 // loop_exit
    _

// kernel: coatt_layer_forward.5
$region0: #{coatt_layer_forward.5}
  #allocation0 [shape = 'u32[]', space=smem, size = 0x4, offset = 0x4, fixed_abs, tag = 'smem constant byte address 0x4 - core index']
  #allocation1 [shape = 'u32[144,128]{1,0:T(1,128)}', space=vmem, size = 0x12000, scoped, tag = 'internal scratch']
  %s0 = inlined_call_operand.vmem [shape: bf16[2,32,256], index: 0, kind: input, shape index: {}]
  %s1 = inlined_call_operand.vmem [shape: bf16[2,32,256], index: 1, kind: input, shape index: {}]
  %s2 = inlined_call_operand.vmem [shape: f32[2,1,256], index: 2, kind: output, shape index: {}]
  %s3 = sld [smem:[#allocation0]]
  $region41: #{coatt_layer_forward.5} parent=0
    _
  %s5 = ssub.s32 1, %s3
  %s6 = scalar_select 0, %s5, %s3
  loop: start=0, step=1, limit=4
  $region2: #{coatt_layer_forward.5} parent=0 // loop_pre_header
    _
  $region3: #{coatt_layer_forward.5} parent=0 // loop_header
    %s8 = sphi 0, %s12
    %p9 = scmp.ge.s32.totalorder %s8, 4
    %s18 = sphi 0, %s20
    %s21 = sphi 0, %s18
    %s22 = sphi 0, %s21
    %s38 = sphi 0, %s22
    %s42 = sphi 0, %s42
    %s44 = sphi 0, %s42
    %s45 = sphi 0, %s44
    %s59 = sphi 0, %s45
    %s65 = sphi 0, %s67
    %s68 = sphi 0, %s65
    %s69 = sphi 0, %s68
    %s85 = sphi 0, %s69
  $region4: #{coatt_layer_forward.5} parent=0 // loop_header_branch
    %11 = sbr.rel (%p9) target = $region8
  $region5: #{coatt_layer_forward.5} parent=0 // loop_body
    %s13 = ssub.s32 %s8, 1
    %s14 = ssub.s32 %s8, 2
    %s15 = sadd.s32 %s8, 1
    %s16 = ssub.s32 %s8, %s15
    %p17 = scmp.eq.s32.totalorder %s16, 0
    %s19 = sadd.s32 %s18, 1
    %s20 = scalar_select %p17, %s18, %s19
    %p23 = pneg %p17
    %p24 = scmp.eq.s32.totalorder %s8, 1
    %p25 = por %p23, %p24
    %p26 = scmp.ne.s32.totalorder %s18, %s21
    %p27 = scmp.eq.s32.totalorder %s8, 0
    %p28 = por %p26, %p27
    %p29 = scmp.ne.s32.totalorder %s18, %s21
    %p30 = scmp.eq.s32.totalorder %s13, 1
    %p31 = por %p29, %p30
    %p32 = scmp.ne.s32.totalorder %s21, %s22
    %p33 = scmp.eq.s32.totalorder %s13, 0
    %p34 = por %p32, %p33
    %p35 = scmp.ne.s32.totalorder %s21, %s22
    %p36 = scmp.eq.s32.totalorder %s14, 1
    %p37 = por %p35, %p36
    %p39 = scmp.ne.s32.totalorder %s22, %s38
    %p40 = scmp.eq.s32.totalorder %s14, 0
    %p41 = por %p39, %p40
    %s43 = sadd.s32 %s42, 1
    %p46 = scmp.eq.s32.totalorder %s8, 1
    %p47 = scmp.ne.s32.totalorder %s42, %s44
    %p48 = scmp.eq.s32.totalorder %s8, 0
    %p49 = por %p47, %p48
    %p50 = scmp.ne.s32.totalorder %s42, %s44
    %p51 = scmp.eq.s32.totalorder %s13, 1
    %p52 = por %p50, %p51
    %p53 = scmp.ne.s32.totalorder %s44, %s45
    %p54 = scmp.eq.s32.totalorder %s13, 0
    %p55 = por %p53, %p54
    %p56 = scmp.ne.s32.totalorder %s44, %s45
    %p57 = scmp.eq.s32.totalorder %s14, 1
    %p58 = por %p56, %p57
    %p60 = scmp.ne.s32.totalorder %s45, %s59
    %p61 = scmp.eq.s32.totalorder %s14, 0
    %p62 = por %p60, %p61
    %s63 = ssub.s32 %s8, %s15
    %p64 = scmp.eq.s32.totalorder %s63, 0
    %s66 = sadd.s32 %s65, 1
    %s67 = scalar_select %p64, %s65, %s66
    %p70 = pneg %p64
    %p71 = scmp.eq.s32.totalorder %s8, 1
    %p72 = por %p70, %p71
    %p73 = scmp.ne.s32.totalorder %s65, %s68
    %p74 = scmp.eq.s32.totalorder %s8, 0
    %p75 = por %p73, %p74
    %p76 = scmp.ne.s32.totalorder %s65, %s68
    %p77 = scmp.eq.s32.totalorder %s13, 1
    %p78 = por %p76, %p77
    %p79 = scmp.ne.s32.totalorder %s68, %s69
    %p80 = scmp.eq.s32.totalorder %s13, 0
    %p81 = por %p79, %p80
    %p82 = scmp.ne.s32.totalorder %s68, %s69
    %p83 = scmp.eq.s32.totalorder %s14, 1
    %p84 = por %p82, %p83
    %p86 = scmp.ne.s32.totalorder %s69, %s85
    %p87 = scmp.eq.s32.totalorder %s14, 0
    %p88 = por %p86, %p87
    %p89 = scmp.le.s32.totalorder 1, %s8
    %p90 = scmp.lt.s32.totalorder %s8, 3
    %p91 = pnand %p89, %p90
    %p92 = pneg %p91
    // Predicated region
    $region9: #{coatt_layer_forward.5} parent=5 // pred_check
      _
    $region10: #{coatt_layer_forward.5} parent=5 // pred_check_branch
      %94 = sbr.rel (%p91) target = $region12
    $region11: #{coatt_layer_forward.5} parent=5 // pred_region
      %s95 = ssub.s32 %s8, 1
      // Predicated region
      $region13: #{coatt_layer_forward.5} parent=11 // pred_check
        %p96 = pneg %p55
      $region14: #{coatt_layer_forward.5} parent=11 // pred_check_branch
        %98 = sbr.rel (%p96) target = $region16
      $region15: #{coatt_layer_forward.5} parent=11 // pred_region
        _
      $region16: #{coatt_layer_forward.5} parent=11 // pred_fallthru
        _
    $region12: #{coatt_layer_forward.5} parent=5 // pred_fallthru
      _
    %p99 = scmp.lt.s32.totalorder %s8, 2
    // Predicated region
    $region17: #{coatt_layer_forward.5} parent=5 // pred_check
      %p100 = pneg %p99
    $region18: #{coatt_layer_forward.5} parent=5 // pred_check_branch
      %102 = sbr.rel (%p100) target = $region20
    $region19: #{coatt_layer_forward.5} parent=5 // pred_region
      // Predicated region
      $region21: #{coatt_layer_forward.5} parent=19 // pred_check
        %p103 = pneg %p28
      $region22: #{coatt_layer_forward.5} parent=19 // pred_check_branch
        %105 = sbr.rel (%p103) target = $region24
      $region23: #{coatt_layer_forward.5} parent=19 // pred_region
        %p106 = scmp.lt.s32.totalorder %s8, 1
        %s107 = scalar_select %p106, %s8, 1
        %s108 = smul.addr %s107, 8
        %s109 = smul.addr %s108, 4
        %s110 = scalar_lea.vmem %s0, %s109
      $region24: #{coatt_layer_forward.5} parent=19 // pred_fallthru
        _
    $region20: #{coatt_layer_forward.5} parent=5 // pred_fallthru
      _
    %p111 = scmp.le.s32.totalorder 1, %s8
    %p112 = scmp.lt.s32.totalorder %s8, 3
    %p113 = pnand %p111, %p112
    %p114 = pneg %p113
    // Predicated region
    $region25: #{coatt_layer_forward.5} parent=5 // pred_check
      _
    $region26: #{coatt_layer_forward.5} parent=5 // pred_check_branch
      %116 = sbr.rel (%p113) target = $region28
    $region27: #{coatt_layer_forward.5} parent=5 // pred_region
      %s117 = ssub.s32 %s8, 1
      %p118 = scmp.lt.s32.totalorder %s13, 1
      %s119 = scalar_select %p118, %s13, 1
      %s120 = smul.addr %s119, 8
      %s121 = smul.addr %s120, 4
      %s122 = scalar_lea.vmem %s0, %s121
      %p123 = pneg %p34
      %p124 = pneg %p31
      %p125 = pneg %p55
      %p126 = pneg %p52
      %p127 = pneg %p81
      %p128 = pneg %p78
      %p129 = scmp.lt.s32.totalorder %s13, 1
      %s130 = scalar_select %p129, %s13, 1
      %s131 = smul.addr %s130, 2
      %s132 = scalar_lea.vmem %s2, %s131
      %p133 = scmp.lt.s32.totalorder %s13, 1
      %s134 = scalar_select %p133, %s13, 1
      %s135 = smul.addr %s134, 8
      %s136 = smul.addr %s135, 4
      %s137 = scalar_lea.vmem %s0, %s136
      %p138 = scmp.lt.s32.totalorder %s13, 1
      %s139 = scalar_select %p138, %s13, 1
      %s140 = smul.addr %s139, 2
      %s141 = scalar_lea.vmem %s2, %s140
      %v143 = vld [vmem:[%s137] sm:$0xff]
      %v144 = vld [vmem:[%s137 + $0x8] sm:$0xff]
      %v145 = vld [vmem:[%s137 + $0x10] sm:$0xff]
      %v146 = vld [vmem:[%s137 + $0x18] sm:$0xff]
      %v147 = vld [vmem:[%s1] sm:$0xff]
      %v148 = vld [vmem:[%s1 + $0x8] sm:$0xff]
      %v149 = vld [vmem:[%s1 + $0x10] sm:$0xff]
      %v150 = vld [vmem:[%s1 + $0x18] sm:$0xff]
      %v155 = vunpack.c.l.b16 %v147
      %v156 = vunpack.c.h.b16 %v147
      %v157 = vunpack.c.l.b16 %v148
      %v158 = vunpack.c.h.b16 %v148
      %v159 = vunpack.c.l.b16 %v149
      %v160 = vunpack.c.h.b16 %v149
      %v161 = vunpack.c.l.b16 %v150
      %v162 = vunpack.c.h.b16 %v150
      %v163 = vpack.c.b16 %v157, %v155
      %v164 = vpack.c.b16 %v158, %v156
      %v165 = vpack.c.b16 %v161, %v159
      %v166 = vpack.c.b16 %v162, %v160
      %171 = vxpose.xlu0.c.b16.start [1/8] %v163, 128
      %172 = vxpose.xlu0.c.b16.cont [2/8] %v165, 128
      %173 = vxpose.xlu0.c.b16.cont [3/8] 0, 128
      %174 = vxpose.xlu0.c.b16.cont [4/8] 0, 128
      %175 = vxpose.xlu0.c.b16.cont [5/8] 0, 128
      %176 = vxpose.xlu0.c.b16.cont [6/8] 0, 128
      %177 = vxpose.xlu0.c.b16.cont [7/8] 0, 128
      %178 = vxpose.xlu0.c.b16.end [8/8] 0, 128
      %v179 = vpop.trf.xlu0
      %v180 = vpop.trf.xlu0
      %v181 = vpop.trf.xlu0
      %v182 = vpop.trf.xlu0
      %v183 = vpop.trf.xlu0
      %v184 = vpop.trf.xlu0
      %v185 = vpop.trf.xlu0
      %v186 = vpop.trf.xlu0
      %187 = vxpose.xlu0.c.b16.start [1/8] %v164, 128
      %188 = vxpose.xlu0.c.b16.cont [2/8] %v166, 128
      %189 = vxpose.xlu0.c.b16.cont [3/8] 0, 128
      %190 = vxpose.xlu0.c.b16.cont [4/8] 0, 128
      %191 = vxpose.xlu0.c.b16.cont [5/8] 0, 128
      %192 = vxpose.xlu0.c.b16.cont [6/8] 0, 128
      %193 = vxpose.xlu0.c.b16.cont [7/8] 0, 128
      %194 = vxpose.xlu0.c.b16.end [8/8] 0, 128
      %v195 = vpop.trf.xlu0
      %v196 = vpop.trf.xlu0
      %v197 = vpop.trf.xlu0
      %v198 = vpop.trf.xlu0
      %v199 = vpop.trf.xlu0
      %v200 = vpop.trf.xlu0
      %v201 = vpop.trf.xlu0
      %v202 = vpop.trf.xlu0
      %v207 = vunpack.c.l.b16 %v143
      %v208 = vunpack.c.h.b16 %v143
      %v209 = vunpack.c.l.b16 %v144
      %v210 = vunpack.c.h.b16 %v144
      %v211 = vunpack.c.l.b16 %v145
      %v212 = vunpack.c.h.b16 %v145
      %v213 = vunpack.c.l.b16 %v146
      %v214 = vunpack.c.h.b16 %v146
      %v215 = vpack.c.b16 %v209, %v207
      %v216 = vpack.c.b16 %v210, %v208
      %v217 = vpack.c.b16 %v213, %v211
      %v218 = vpack.c.b16 %v214, %v212
      %vm223 = vcmask 261120
      %v225 = vsel %vm223, %v179, 0
      %v228 = vsel %vm223, %v180, 0
      %v231 = vsel %vm223, %v181, 0
      %v234 = vsel %vm223, %v182, 0
      %v237 = vsel %vm223, %v183, 0
      %v240 = vsel %vm223, %v184, 0
      %v243 = vsel %vm223, %v185, 0
      %v246 = vsel %vm223, %v186, 0
      %v249 = vsel %vm223, %v195, 0
      %v252 = vsel %vm223, %v196, 0
      %v255 = vsel %vm223, %v197, 0
      %v258 = vsel %vm223, %v198, 0
      %v261 = vsel %vm223, %v199, 0
      %v264 = vsel %vm223, %v200, 0
      %v267 = vsel %vm223, %v201, 0
      %v270 = vsel %vm223, %v202, 0
      %272 = vmatprep.subr.bf16.mxu0 %v216
      %273 = vmatpush1.bf16.msra.mxu0 %v215
      %274 = vmatprep.subr.bf16.mxu0 %v218
      %275 = vmatpush1.bf16.msra.mxu0 %v217
      %276 = vmatprep.subr.bf16.mxu0 0
      %277 = vmatpush1.bf16.msra.mxu0 0
      %278 = vmatprep.subr.bf16.mxu0 0
      %279 = vmatpush1.bf16.msra.mxu0 0
      %280 = vmatprep.subr.bf16.mxu0 0
      %281 = vmatpush1.bf16.msra.mxu0 0
      %282 = vmatprep.subr.bf16.mxu0 0
      %283 = vmatpush1.bf16.msra.mxu0 0
      %284 = vmatprep.subr.bf16.mxu0 0
      %285 = vmatpush1.bf16.msra.mxu0 0
      %286 = vmatprep.subr.bf16.mxu0 0
      %287 = vmatpush1.bf16.msra.mxu0 0
      %288 = vmatprep.subr.bf16.mxu0 0
      %289 = vmatpush1.bf16.msra.mxu0 0
      %290 = vmatprep.subr.bf16.mxu0 0
      %291 = vmatpush1.bf16.msra.mxu0 0
      %292 = vmatprep.subr.bf16.mxu0 0
      %293 = vmatpush1.bf16.msra.mxu0 0
      %294 = vmatprep.subr.bf16.mxu0 0
      %295 = vmatpush1.bf16.msra.mxu0 0
      %296 = vmatprep.subr.bf16.mxu0 0
      %297 = vmatpush1.bf16.msra.mxu0 0
      %298 = vmatprep.subr.bf16.mxu0 0
      %299 = vmatpush1.bf16.msra.mxu0 0
      %300 = vmatprep.subr.bf16.mxu0 0
      %301 = vmatpush1.bf16.msra.mxu0 0
      %302 = vmatprep.subr.bf16.mxu0 0
      %303 = vmatpush1.bf16.msra.mxu0 0
      %304 = vmatprep.mubr.bf16.mxu0 0
      %305 = vmatmul.mubr.bf16.gmra.mrb[0].mxu0 %v225
      %v306 = vpop.f32.mrb[0].mxu0
      %v307 = vadd.f32 0.0, %v306
      %v308 = vpop.f32.mrb[0].mxu0
      %v309 = vadd.f32 0.0, %v308
      %v310 = vpop.f32.mrb[0].mxu0
      %v311 = vadd.f32 0.0, %v310
      %v312 = vpop.f32.mrb[0].mxu0
      %v313 = vadd.f32 0.0, %v312
      %314 = vmatprep.mubr.bf16.mxu0 0
      %315 = vmatmul.mubr.bf16.gmra.mrb[0].mxu0 %v228
      %v316 = vpop.f32.mrb[0].mxu0
      %v317 = vadd.f32 0.0, %v316
      %v318 = vpop.f32.mrb[0].mxu0
      %v319 = vadd.f32 0.0, %v318
      %v320 = vpop.f32.mrb[0].mxu0
      %v321 = vadd.f32 0.0, %v320
      %v322 = vpop.f32.mrb[0].mxu0
      %v323 = vadd.f32 0.0, %v322
      %324 = vmatprep.mubr.bf16.mxu0 0
      %325 = vmatmul.mubr.bf16.gmra.mrb[0].mxu0 %v231
      %v326 = vpop.f32.mrb[0].mxu0
      %v327 = vadd.f32 0.0, %v326
      %v328 = vpop.f32.mrb[0].mxu0
      %v329 = vadd.f32 0.0, %v328
      %v330 = vpop.f32.mrb[0].mxu0
      %v331 = vadd.f32 0.0, %v330
      %v332 = vpop.f32.mrb[0].mxu0
      %v333 = vadd.f32 0.0, %v332
      %334 = vmatprep.mubr.bf16.mxu0 0
      %335 = vmatmul.mubr.bf16.gmra.mrb[0].mxu0 %v234
      %v336 = vpop.f32.mrb[0].mxu0
      %v337 = vadd.f32 0.0, %v336
      %v338 = vpop.f32.mrb[0].mxu0
      %v339 = vadd.f32 0.0, %v338
      %v340 = vpop.f32.mrb[0].mxu0
      %v341 = vadd.f32 0.0, %v340
      %v342 = vpop.f32.mrb[0].mxu0
      %v343 = vadd.f32 0.0, %v342
      %344 = vmatprep.mubr.bf16.mxu0 0
      %345 = vmatmul.mubr.bf16.gmra.mrb[0].mxu0 %v237
      %v346 = vpop.f32.mrb[0].mxu0
      %v347 = vadd.f32 0.0, %v346
      %v348 = vpop.f32.mrb[0].mxu0
      %v349 = vadd.f32 0.0, %v348
      %v350 = vpop.f32.mrb[0].mxu0
      %v351 = vadd.f32 0.0, %v350
      %v352 = vpop.f32.mrb[0].mxu0
      %v353 = vadd.f32 0.0, %v352
      %354 = vmatprep.mubr.bf16.mxu0 0
      %355 = vmatmul.mubr.bf16.gmra.mrb[0].mxu0 %v240
      %v356 = vpop.f32.mrb[0].mxu0
      %v357 = vadd.f32 0.0, %v356
      %v358 = vpop.f32.mrb[0].mxu0
      %v359 = vadd.f32 0.0, %v358
      %v360 = vpop.f32.mrb[0].mxu0
      %v361 = vadd.f32 0.0, %v360
      %v362 = vpop.f32.mrb[0].mxu0
      %v363 = vadd.f32 0.0, %v362
      %364 = vmatprep.mubr.bf16.mxu0 0
      %365 = vmatmul.mubr.bf16.gmra.mrb[0].mxu0 %v243
      %v366 = vpop.f32.mrb[0].mxu0
      %v367 = vadd.f32 0.0, %v366
      %v368 = vpop.f32.mrb[0].mxu0
      %v369 = vadd.f32 0.0, %v368
      %v370 = vpop.f32.mrb[0].mxu0
      %v371 = vadd.f32 0.0, %v370
      %v372 = vpop.f32.mrb[0].mxu0
      %v373 = vadd.f32 0.0, %v372
      %374 = vmatprep.mubr.bf16.mxu0 0
      %375 = vmatmul.mubr.bf16.gmra.mrb[0].mxu0 %v246
      %v376 = vpop.f32.mrb[0].mxu0
      %v377 = vadd.f32 0.0, %v376
      %v378 = vpop.f32.mrb[0].mxu0
      %v379 = vadd.f32 0.0, %v378
      %v380 = vpop.f32.mrb[0].mxu0
      %v381 = vadd.f32 0.0, %v380
      %v382 = vpop.f32.mrb[0].mxu0
      %v383 = vadd.f32 0.0, %v382
      %384 = vmatprep.mubr.bf16.mxu0 0
      %385 = vmatmul.mubr.bf16.gmra.mrb[0].mxu0 %v249
      %v386 = vpop.f32.mrb[0].mxu0
      %v387 = vadd.f32 0.0, %v386
      %v388 = vpop.f32.mrb[0].mxu0
      %v389 = vadd.f32 0.0, %v388
      %v390 = vpop.f32.mrb[0].mxu0
      %v391 = vadd.f32 0.0, %v390
      %v392 = vpop.f32.mrb[0].mxu0
      %v393 = vadd.f32 0.0, %v392
      %394 = vmatprep.mubr.bf16.mxu0 0
      %395 = vmatmul.mubr.bf16.gmra.mrb[0].mxu0 %v252
      %v396 = vpop.f32.mrb[0].mxu0
      %v397 = vadd.f32 0.0, %v396
      %v398 = vpop.f32.mrb[0].mxu0
      %v399 = vadd.f32 0.0, %v398
      %v400 = vpop.f32.mrb[0].mxu0
      %v401 = vadd.f32 0.0, %v400
      %v402 = vpop.f32.mrb[0].mxu0
      %v403 = vadd.f32 0.0, %v402
      %404 = vmatprep.mubr.bf16.mxu0 0
      %405 = vmatmul.mubr.bf16.gmra.mrb[0].mxu0 %v255
      %v406 = vpop.f32.mrb[0].mxu0
      %v407 = vadd.f32 0.0, %v406
      %v408 = vpop.f32.mrb[0].mxu0
      %v409 = vadd.f32 0.0, %v408
      %v410 = vpop.f32.mrb[0].mxu0
      %v411 = vadd.f32 0.0, %v410
      %v412 = vpop.f32.mrb[0].mxu0
      %v413 = vadd.f32 0.0, %v412
      %414 = vmatprep.mubr.bf16.mxu0 0
      %415 = vmatmul.mubr.bf16.gmra.mrb[0].mxu0 %v258
      %v416 = vpop.f32.mrb[0].mxu0
      %v417 = vadd.f32 0.0, %v416
      %v418 = vpop.f32.mrb[0].mxu0
      %v419 = vadd.f32 0.0, %v418
      %v420 = vpop.f32.mrb[0].mxu0
      %v421 = vadd.f32 0.0, %v420
      %v422 = vpop.f32.mrb[0].mxu0
      %v423 = vadd.f32 0.0, %v422
      %424 = vmatprep.mubr.bf16.mxu0 0
      %425 = vmatmul.mubr.bf16.gmra.mrb[0].mxu0 %v261
      %v426 = vpop.f32.mrb[0].mxu0
      %v427 = vadd.f32 0.0, %v426
      %v428 = vpop.f32.mrb[0].mxu0
      %v429 = vadd.f32 0.0, %v428
      %v430 = vpop.f32.mrb[0].mxu0
      %v431 = vadd.f32 0.0, %v430
      %v432 = vpop.f32.mrb[0].mxu0
      %v433 = vadd.f32 0.0, %v432
      %434 = vmatprep.mubr.bf16.mxu0 0
      %435 = vmatmul.mubr.bf16.gmra.mrb[0].mxu0 %v264
      %v436 = vpop.f32.mrb[0].mxu0
      %v437 = vadd.f32 0.0, %v436
      %v438 = vpop.f32.mrb[0].mxu0
      %v439 = vadd.f32 0.0, %v438
      %v440 = vpop.f32.mrb[0].mxu0
      %v441 = vadd.f32 0.0, %v440
      %v442 = vpop.f32.mrb[0].mxu0
      %v443 = vadd.f32 0.0, %v442
      %444 = vmatprep.mubr.bf16.mxu0 0
      %445 = vmatmul.mubr.bf16.gmra.mrb[0].mxu0 %v267
      %v446 = vpop.f32.mrb[0].mxu0
      %v447 = vadd.f32 0.0, %v446
      %v448 = vpop.f32.mrb[0].mxu0
      %v449 = vadd.f32 0.0, %v448
      %v450 = vpop.f32.mrb[0].mxu0
      %v451 = vadd.f32 0.0, %v450
      %v452 = vpop.f32.mrb[0].mxu0
      %v453 = vadd.f32 0.0, %v452
      %454 = vmatprep.mubr.bf16.mxu0 0
      %455 = vmatmul.mubr.bf16.gmra.mrb[0].mxu0 %v270
      %v456 = vpop.f32.mrb[0].mxu0
      %v457 = vadd.f32 0.0, %v456
      %v458 = vpop.f32.mrb[0].mxu0
      %v459 = vadd.f32 0.0, %v458
      %v460 = vpop.f32.mrb[0].mxu0
      %v461 = vadd.f32 0.0, %v460
      %v462 = vpop.f32.mrb[0].mxu0
      %v463 = vadd.f32 0.0, %v462
      %464 = vdwg.mxu0
      %v465 = vmax.f32 %v307, %v317
      %v466 = vmax.f32 %v311, %v321
      %v467 = vmax.f32 %v465, %v327
      %v468 = vmax.f32 %v466, %v331
      %v469 = vmax.f32 %v467, %v337
      %v470 = vmax.f32 %v468, %v341
      %v471 = vmax.f32 %v469, %v347
      %v472 = vmax.f32 %v470, %v351
      %v473 = vmax.f32 %v471, %v357
      %v474 = vmax.f32 %v472, %v361
      %v475 = vmax.f32 %v473, %v367
      %v476 = vmax.f32 %v474, %v371
      %v477 = vmax.f32 %v475, %v377
      %v478 = vmax.f32 %v476, %v381
      %v479 = vmax.f32 %v477, %v387
      %v480 = vmax.f32 %v478, %v391
      %v481 = vmax.f32 %v479, %v397
      %v482 = vmax.f32 %v480, %v401
      %v483 = vmax.f32 %v481, %v407
      %v484 = vmax.f32 %v482, %v411
      %v485 = vmax.f32 %v483, %v417
      %v486 = vmax.f32 %v484, %v421
      %v487 = vmax.f32 %v485, %v427
      %v488 = vmax.f32 %v486, %v431
      %v489 = vmax.f32 %v487, %v437
      %v490 = vmax.f32 %v488, %v441
      %v491 = vmax.f32 %v489, %v447
      %v492 = vmax.f32 %v490, %v451
      %v493 = vmax.f32 %v491, %v457
      %v494 = vmax.f32 %v492, %v461
      %v495 = vmax.f32 %v493, %v494
      %v496 = vrot.slane %v495, 4
      %v497 = vmax.f32 %v495, %v496
      %v498 = vrot.slane %v497, 2
      %v499 = vmax.f32 %v497, %v498
      %v500 = vrot.slane %v499, 1
      %v501 = vmax.f32 %v499, %v500
      %v502 = vmax.f32 %v309, %v319
      %v503 = vmax.f32 %v313, %v323
      %v504 = vmax.f32 %v502, %v329
      %v505 = vmax.f32 %v503, %v333
      %v506 = vmax.f32 %v504, %v339
      %v507 = vmax.f32 %v505, %v343
      %v508 = vmax.f32 %v506, %v349
      %v509 = vmax.f32 %v507, %v353
      %v510 = vmax.f32 %v508, %v359
      %v511 = vmax.f32 %v509, %v363
      %v512 = vmax.f32 %v510, %v369
      %v513 = vmax.f32 %v511, %v373
      %v514 = vmax.f32 %v512, %v379
      %v515 = vmax.f32 %v513, %v383
      %v516 = vmax.f32 %v514, %v389
      %v517 = vmax.f32 %v515, %v393
      %v518 = vmax.f32 %v516, %v399
      %v519 = vmax.f32 %v517, %v403
      %v520 = vmax.f32 %v518, %v409
      %v521 = vmax.f32 %v519, %v413
      %v522 = vmax.f32 %v520, %v419
      %v523 = vmax.f32 %v521, %v423
      %v524 = vmax.f32 %v522, %v429
      %v525 = vmax.f32 %v523, %v433
      %v526 = vmax.f32 %v524, %v439
      %v527 = vmax.f32 %v525, %v443
      %v528 = vmax.f32 %v526, %v449
      %v529 = vmax.f32 %v527, %v453
      %v530 = vmax.f32 %v528, %v459
      %v531 = vmax.f32 %v529, %v463
      %v532 = vmax.f32 %v530, %v531
      %v533 = vrot.slane %v532, 4
      %v534 = vmax.f32 %v532, %v533
      %v535 = vrot.slane %v534, 2
      %v536 = vmax.f32 %v534, %v535
      %v537 = vrot.slane %v536, 1
      %v538 = vmax.f32 %v536, %v537
      %v539 = vadd.f32 %v501, 0.0
      %v540 = vadd.f32 %v538, 0.0
      %s541 = scalar_lea.vmem %s1, 32
      %v542 = vld [vmem:[%s541] sm:$0xff]
      %v543 = vld [vmem:[%s541 + $0x8] sm:$0xff]
      %v544 = vld [vmem:[%s541 + $0x10] sm:$0xff]
      %v545 = vld [vmem:[%s541 + $0x18] sm:$0xff]
      %v550 = vunpack.c.l.b16 %v542
      %v551 = vunpack.c.h.b16 %v542
      %v552 = vunpack.c.l.b16 %v543
      %v553 = vunpack.c.h.b16 %v543
      %v554 = vunpack.c.l.b16 %v544
      %v555 = vunpack.c.h.b16 %v544
      %v556 = vunpack.c.l.b16 %v545
      %v557 = vunpack.c.h.b16 %v545
      %v558 = vpack.c.b16 %v552, %v550
      %v559 = vpack.c.b16 %v553, %v551
      %v560 = vpack.c.b16 %v556, %v554
      %v561 = vpack.c.b16 %v557, %v555
      %566 = vxpose.xlu0.c.b16.start [1/8] %v558, 128
      %567 = vxpose.xlu0.c.b16.cont [2/8] %v560, 128
      %568 = vxpose.xlu0.c.b16.cont [3/8] 0, 128
      %569 = vxpose.xlu0.c.b16.cont [4/8] 0, 128
      %570 = vxpose.xlu0.c.b16.cont [5/8] 0, 128
      %571 = vxpose.xlu0.c.b16.cont [6/8] 0, 128
      %572 = vxpose.xlu0.c.b16.cont [7/8] 0, 128
      %573 = vxpose.xlu0.c.b16.end [8/8] 0, 128
      %v574 = vpop.trf.xlu0
      %v575 = vpop.trf.xlu0
      %v576 = vpop.trf.xlu0
      %v577 = vpop.trf.xlu0
      %v578 = vpop.trf.xlu0
      %v579 = vpop.trf.xlu0
      %v580 = vpop.trf.xlu0
      %v581 = vpop.trf.xlu0
      %582 = vxpose.xlu0.c.b16.start [1/8] %v559, 128
      %583 = vxpose.xlu0.c.b16.cont [2/8] %v561, 128
      %584 = vxpose.xlu0.c.b16.cont [3/8] 0, 128
      %585 = vxpose.xlu0.c.b16.cont [4/8] 0, 128
      %586 = vxpose.xlu0.c.b16.cont [5/8] 0, 128
      %587 = vxpose.xlu0.c.b16.cont [6/8] 0, 128
      %588 = vxpose.xlu0.c.b16.cont [7/8] 0, 128
      %589 = vxpose.xlu0.c.b16.end [8/8] 0, 128
      %v590 = vpop.trf.xlu0
      %v591 = vpop.trf.xlu0
      %v592 = vpop.trf.xlu0
      %v593 = vpop.trf.xlu0
      %v594 = vpop.trf.xlu0
      %v595 = vpop.trf.xlu0
      %v596 = vpop.trf.xlu0
      %v597 = vpop.trf.xlu0
      %v599 = vsel %vm223, %v574, 0
      %v602 = vsel %vm223, %v575, 0
      %v605 = vsel %vm223, %v576, 0
      %v608 = vsel %vm223, %v577, 0
      %v611 = vsel %vm223, %v578, 0
      %v614 = vsel %vm223, %v579, 0
      %v617 = vsel %vm223, %v580, 0
      %v620 = vsel %vm223, %v581, 0
      %v623 = vsel %vm223, %v590, 0
      %v626 = vsel %vm223, %v591, 0
      %v629 = vsel %vm223, %v592, 0
      %v632 = vsel %vm223, %v593, 0
      %v635 = vsel %vm223, %v594, 0
      %v638 = vsel %vm223, %v595, 0
      %v641 = vsel %vm223, %v596, 0
      %v644 = vsel %vm223, %v597, 0
      %646 = vmatprep.subr.bf16.mxu0 %v216
      %647 = vmatpush1.bf16.msra.mxu0 %v215
      %648 = vmatprep.subr.bf16.mxu0 %v218
      %649 = vmatpush1.bf16.msra.mxu0 %v217
      %650 = vmatprep.subr.bf16.mxu0 0
      %651 = vmatpush1.bf16.msra.mxu0 0
      %652 = vmatprep.subr.bf16.mxu0 0
      %653 = vmatpush1.bf16.msra.mxu0 0
      %654 = vmatprep.subr.bf16.mxu0 0
      %655 = vmatpush1.bf16.msra.mxu0 0
      %656 = vmatprep.subr.bf16.mxu0 0
      %657 = vmatpush1.bf16.msra.mxu0 0
      %658 = vmatprep.subr.bf16.mxu0 0
      %659 = vmatpush1.bf16.msra.mxu0 0
      %660 = vmatprep.subr.bf16.mxu0 0
      %661 = vmatpush1.bf16.msra.mxu0 0
      %662 = vmatprep.subr.bf16.mxu0 0
      %663 = vmatpush1.bf16.msra.mxu0 0
      %664 = vmatprep.subr.bf16.mxu0 0
      %665 = vmatpush1.bf16.msra.mxu0 0
      %666 = vmatprep.subr.bf16.mxu0 0
      %667 = vmatpush1.bf16.msra.mxu0 0
      %668 = vmatprep.subr.bf16.mxu0 0
      %669 = vmatpush1.bf16.msra.mxu0 0
      %670 = vmatprep.subr.bf16.mxu0 0
      %671 = vmatpush1.bf16.msra.mxu0 0
      %672 = vmatprep.subr.bf16.mxu0 0
      %673 = vmatpush1.bf16.msra.mxu0 0
      %674 = vmatprep.subr.bf16.mxu0 0
      %675 = vmatpush1.bf16.msra.mxu0 0
      %676 = vmatprep.subr.bf16.mxu0 0
      %677 = vmatpush1.bf16.msra.mxu0 0
      %678 = vmatprep.mubr.bf16.mxu0 0
      %679 = vmatmul.mubr.bf16.gmra.mrb[0].mxu0 %v599
      %v680 = vpop.f32.mrb[0].mxu0
      %v681 = vadd.f32 0.0, %v680
      %v682 = vpop.f32.mrb[0].mxu0
      %v683 = vadd.f32 0.0, %v682
      %v684 = vpop.f32.mrb[0].mxu0
      %v685 = vadd.f32 0.0, %v684
      %v686 = vpop.f32.mrb[0].mxu0
      %v687 = vadd.f32 0.0, %v686
      %688 = vmatprep.mubr.bf16.mxu0 0
      %689 = vmatmul.mubr.bf16.gmra.mrb[0].mxu0 %v602
      %v690 = vpop.f32.mrb[0].mxu0
      %v691 = vadd.f32 0.0, %v690
      %v692 = vpop.f32.mrb[0].mxu0
      %v693 = vadd.f32 0.0, %v692
      %v694 = vpop.f32.mrb[0].mxu0
      %v695 = vadd.f32 0.0, %v694
      %v696 = vpop.f32.mrb[0].mxu0
      %v697 = vadd.f32 0.0, %v696
      %698 = vmatprep.mubr.bf16.mxu0 0
      %699 = vmatmul.mubr.bf16.gmra.mrb[0].mxu0 %v605
      %v700 = vpop.f32.mrb[0].mxu0
      %v701 = vadd.f32 0.0, %v700
      %v702 = vpop.f32.mrb[0].mxu0
      %v703 = vadd.f32 0.0, %v702
      %v704 = vpop.f32.mrb[0].mxu0
      %v705 = vadd.f32 0.0, %v704
      %v706 = vpop.f32.mrb[0].mxu0
      %v707 = vadd.f32 0.0, %v706
      %708 = vmatprep.mubr.bf16.mxu0 0
      %709 = vmatmul.mubr.bf16.gmra.mrb[0].mxu0 %v608
      %v710 = vpop.f32.mrb[0].mxu0
      %v711 = vadd.f32 0.0, %v710
      %v712 = vpop.f32.mrb[0].mxu0
      %v713 = vadd.f32 0.0, %v712
      %v714 = vpop.f32.mrb[0].mxu0
      %v715 = vadd.f32 0.0, %v714
      %v716 = vpop.f32.mrb[0].mxu0
      %v717 = vadd.f32 0.0, %v716
      %718 = vmatprep.mubr.bf16.mxu0 0
      %719 = vmatmul.mubr.bf16.gmra.mrb[0].mxu0 %v611
      %v720 = vpop.f32.mrb[0].mxu0
      %v721 = vadd.f32 0.0, %v720
      %v722 = vpop.f32.mrb[0].mxu0
      %v723 = vadd.f32 0.0, %v722
      %v724 = vpop.f32.mrb[0].mxu0
      %v725 = vadd.f32 0.0, %v724
      %v726 = vpop.f32.mrb[0].mxu0
      %v727 = vadd.f32 0.0, %v726
      %728 = vmatprep.mubr.bf16.mxu0 0
      %729 = vmatmul.mubr.bf16.gmra.mrb[0].mxu0 %v614
      %v730 = vpop.f32.mrb[0].mxu0
      %v731 = vadd.f32 0.0, %v730
      %v732 = vpop.f32.mrb[0].mxu0
      %v733 = vadd.f32 0.0, %v732
      %v734 = vpop.f32.mrb[0].mxu0
      %v735 = vadd.f32 0.0, %v734
      %v736 = vpop.f32.mrb[0].mxu0
      %v737 = vadd.f32 0.0, %v736
      %738 = vmatprep.mubr.bf16.mxu0 0
      %739 = vmatmul.mubr.bf16.gmra.mrb[0].mxu0 %v617
      %v740 = vpop.f32.mrb[0].mxu0
      %v741 = vadd.f32 0.0, %v740
      %v742 = vpop.f32.mrb[0].mxu0
      %v743 = vadd.f32 0.0, %v742
      %v744 = vpop.f32.mrb[0].mxu0
      %v745 = vadd.f32 0.0, %v744
      %v746 = vpop.f32.mrb[0].mxu0
      %v747 = vadd.f32 0.0, %v746
      %748 = vmatprep.mubr.bf16.mxu0 0
      %749 = vmatmul.mubr.bf16.gmra.mrb[0].mxu0 %v620
      %v750 = vpop.f32.mrb[0].mxu0
      %v751 = vadd.f32 0.0, %v750
      %v752 = vpop.f32.mrb[0].mxu0
      %v753 = vadd.f32 0.0, %v752
      %v754 = vpop.f32.mrb[0].mxu0
      %v755 = vadd.f32 0.0, %v754
      %v756 = vpop.f32.mrb[0].mxu0
      %v757 = vadd.f32 0.0, %v756
      %758 = vmatprep.mubr.bf16.mxu0 0
      %759 = vmatmul.mubr.bf16.gmra.mrb[0].mxu0 %v623
      %v760 = vpop.f32.mrb[0].mxu0
      %v761 = vadd.f32 0.0, %v760
      %v762 = vpop.f32.mrb[0].mxu0
      %v763 = vadd.f32 0.0, %v762
      %v764 = vpop.f32.mrb[0].mxu0
      %v765 = vadd.f32 0.0, %v764
      %v766 = vpop.f32.mrb[0].mxu0
      %v767 = vadd.f32 0.0, %v766
      %768 = vmatprep.mubr.bf16.mxu0 0
      %769 = vmatmul.mubr.bf16.gmra.mrb[0].mxu0 %v626
      %v770 = vpop.f32.mrb[0].mxu0
      %v771 = vadd.f32 0.0, %v770
      %v772 = vpop.f32.mrb[0].mxu0
      %v773 = vadd.f32 0.0, %v772
      %v774 = vpop.f32.mrb[0].mxu0
      %v775 = vadd.f32 0.0, %v774
      %v776 = vpop.f32.mrb[0].mxu0
      %v777 = vadd.f32 0.0, %v776
      %778 = vmatprep.mubr.bf16.mxu0 0
      %779 = vmatmul.mubr.bf16.gmra.mrb[0].mxu0 %v629
      %v780 = vpop.f32.mrb[0].mxu0
      %v781 = vadd.f32 0.0, %v780
      %v782 = vpop.f32.mrb[0].mxu0
      %v783 = vadd.f32 0.0, %v782
      %v784 = vpop.f32.mrb[0].mxu0
      %v785 = vadd.f32 0.0, %v784
      %v786 = vpop.f32.mrb[0].mxu0
      %v787 = vadd.f32 0.0, %v786
      %788 = vmatprep.mubr.bf16.mxu0 0
      %789 = vmatmul.mubr.bf16.gmra.mrb[0].mxu0 %v632
      %v790 = vpop.f32.mrb[0].mxu0
      %v791 = vadd.f32 0.0, %v790
      %v792 = vpop.f32.mrb[0].mxu0
      %v793 = vadd.f32 0.0, %v792
      %v794 = vpop.f32.mrb[0].mxu0
      %v795 = vadd.f32 0.0, %v794
      %v796 = vpop.f32.mrb[0].mxu0
      %v797 = vadd.f32 0.0, %v796
      %798 = vmatprep.mubr.bf16.mxu0 0
      %799 = vmatmul.mubr.bf16.gmra.mrb[0].mxu0 %v635
      %v800 = vpop.f32.mrb[0].mxu0
      %v801 = vadd.f32 0.0, %v800
      %v802 = vpop.f32.mrb[0].mxu0
      %v803 = vadd.f32 0.0, %v802
      %v804 = vpop.f32.mrb[0].mxu0
      %v805 = vadd.f32 0.0, %v804
      %v806 = vpop.f32.mrb[0].mxu0
      %v807 = vadd.f32 0.0, %v806
      %808 = vmatprep.mubr.bf16.mxu0 0
      %809 = vmatmul.mubr.bf16.gmra.mrb[0].mxu0 %v638
      %v810 = vpop.f32.mrb[0].mxu0
      %v811 = vadd.f32 0.0, %v810
      %v812 = vpop.f32.mrb[0].mxu0
      %v813 = vadd.f32 0.0, %v812
      %v814 = vpop.f32.mrb[0].mxu0
      %v815 = vadd.f32 0.0, %v814
      %v816 = vpop.f32.mrb[0].mxu0
      %v817 = vadd.f32 0.0, %v816
      %818 = vmatprep.mubr.bf16.mxu0 0
      %819 = vmatmul.mubr.bf16.gmra.mrb[0].mxu0 %v641
      %v820 = vpop.f32.mrb[0].mxu0
      %v821 = vadd.f32 0.0, %v820
      %v822 = vpop.f32.mrb[0].mxu0
      %v823 = vadd.f32 0.0, %v822
      %v824 = vpop.f32.mrb[0].mxu0
      %v825 = vadd.f32 0.0, %v824
      %v826 = vpop.f32.mrb[0].mxu0
      %v827 = vadd.f32 0.0, %v826
      %828 = vmatprep.mubr.bf16.mxu0 0
      %829 = vmatmul.mubr.bf16.gmra.mrb[0].mxu0 %v644
      %v830 = vpop.f32.mrb[0].mxu0
      %v831 = vadd.f32 0.0, %v830
      %v832 = vpop.f32.mrb[0].mxu0
      %v833 = vadd.f32 0.0, %v832
      %v834 = vpop.f32.mrb[0].mxu0
      %v835 = vadd.f32 0.0, %v834
      %v836 = vpop.f32.mrb[0].mxu0
      %v837 = vadd.f32 0.0, %v836
      %838 = vdwg.mxu0
      %v839 = vmax.f32 %v681, %v691
      %v840 = vmax.f32 %v685, %v695
      %v841 = vmax.f32 %v839, %v701
      %v842 = vmax.f32 %v840, %v705
      %v843 = vmax.f32 %v841, %v711
      %v844 = vmax.f32 %v842, %v715
      %v845 = vmax.f32 %v843, %v721
      %v846 = vmax.f32 %v844, %v725
      %v847 = vmax.f32 %v845, %v731
      %v848 = vmax.f32 %v846, %v735
      %v849 = vmax.f32 %v847, %v741
      %v850 = vmax.f32 %v848, %v745
      %v851 = vmax.f32 %v849, %v751
      %v852 = vmax.f32 %v850, %v755
      %v853 = vmax.f32 %v851, %v761
      %v854 = vmax.f32 %v852, %v765
      %v855 = vmax.f32 %v853, %v771
      %v856 = vmax.f32 %v854, %v775
      %v857 = vmax.f32 %v855, %v781
      %v858 = vmax.f32 %v856, %v785
      %v859 = vmax.f32 %v857, %v791
      %v860 = vmax.f32 %v858, %v795
      %v861 = vmax.f32 %v859, %v801
      %v862 = vmax.f32 %v860, %v805
      %v863 = vmax.f32 %v861, %v811
      %v864 = vmax.f32 %v862, %v815
      %v865 = vmax.f32 %v863, %v821
      %v866 = vmax.f32 %v864, %v825
      %v867 = vmax.f32 %v865, %v831
      %v868 = vmax.f32 %v866, %v835
      %v869 = vmax.f32 %v867, %v868
      %v870 = vrot.slane %v869, 4
      %v871 = vmax.f32 %v869, %v870
      %v872 = vrot.slane %v871, 2
      %v873 = vmax.f32 %v871, %v872
      %v874 = vrot.slane %v873, 1
      %v875 = vmax.f32 %v873, %v874
      %v876 = vmax.f32 %v683, %v693
      %v877 = vmax.f32 %v687, %v697
      %v878 = vmax.f32 %v876, %v703
      %v879 = vmax.f32 %v877, %v707
      %v880 = vmax.f32 %v878, %v713
      %v881 = vmax.f32 %v879, %v717
      %v882 = vmax.f32 %v880, %v723
      %v883 = vmax.f32 %v881, %v727
      %v884 = vmax.f32 %v882, %v733
      %v885 = vmax.f32 %v883, %v737
      %v886 = vmax.f32 %v884, %v743
      %v887 = vmax.f32 %v885, %v747
      %v888 = vmax.f32 %v886, %v753
      %v889 = vmax.f32 %v887, %v757
      %v890 = vmax.f32 %v888, %v763
      %v891 = vmax.f32 %v889, %v767
      %v892 = vmax.f32 %v890, %v773
      %v893 = vmax.f32 %v891, %v777
      %v894 = vmax.f32 %v892, %v783
      %v895 = vmax.f32 %v893, %v787
      %v896 = vmax.f32 %v894, %v793
      %v897 = vmax.f32 %v895, %v797
      %v898 = vmax.f32 %v896, %v803
      %v899 = vmax.f32 %v897, %v807
      %v900 = vmax.f32 %v898, %v813
      %v901 = vmax.f32 %v899, %v817
      %v902 = vmax.f32 %v900, %v823
      %v903 = vmax.f32 %v901, %v827
      %v904 = vmax.f32 %v902, %v833
      %v905 = vmax.f32 %v903, %v837
      %v906 = vmax.f32 %v904, %v905
      %v907 = vrot.slane %v906, 4
      %v908 = vmax.f32 %v906, %v907
      %v909 = vrot.slane %v908, 2
      %v910 = vmax.f32 %v908, %v909
      %v911 = vrot.slane %v910, 1
      %v912 = vmax.f32 %v910, %v911
      %v913 = vadd.f32 %v539, %v875
      %v914 = vadd.f32 %v540, %v912
      %v915 = vmul.f32 %v913, 0.088388346
      %v916 = vmul.f32 %v914, 0.088388346
      %v917 = vmax.f32 %v915, %v916
      %918 = vmax.xlane.f32.xlu0 %v917
      %v919 = vpop.xlane.xlu0 %918
      %v920 = vsub.f32 %v915, %v919
      %v921 = vsub.f32 %v916, %v919
      %v922 = vmul.f32 %v920, 1.442695
      %v923 = vpow.pop %v922
      %v924 = vmul.f32 %v921, 1.442695
      %v925 = vpow.pop %v924
      %v926 = vadd.f32 %v923, %v925
      %927 = vadd.xlane.f32.xlu0 %v926
      %v928 = vpop.xlane.xlu0 %927
      %v929 = vrcp.pop %v928
      %v930 = vmul.f32 %v923, %v929
      %v931 = vmul.f32 %v925, %v929
      %v934 = vcombine.low %v930, %v931
      %v936 = vunpack.c.l.s4 1966171168
      %v937 = vunpack.c.0.s8 %v936
      %v938 = vlaneseq
      %v939 = vshrl.u32 %v938, 7
      %v940 = vsub.s32 %v937, %v939
      %v941 = vrot.slane %v934, %v940
      %v943 = vunpack.c.l.s4 1966171168
      %v944 = vunpack.c.0.s8 %v943
      %v945 = vlaneseq
      %v946 = vshrl.u32 %v945, 7
      %v947 = vsub.s32 %v944, %v946
      %v948 = vrot.slane %v941, %v947
      %v950 = vlaneseq
      %vm951 = vcmp.ge.s32.totalorder %v950, 0
      %vm952 = vcmp.lt.s32.totalorder %v950, 256
      %vm953 = vmand %vm951, %vm952
      %954 = vst.msk [vmem:[%s141] sm:$0x3] %vm953, %v948
      %p955 = scmp.lt.s32.totalorder %s13, 1
      %s956 = scalar_select %p955, %s13, 1
      %s957 = smul.addr %s956, 2
      %s958 = scalar_lea.vmem %s2, %s957
      // Predicated region
      $region29: #{coatt_layer_forward.5} parent=27 // pred_check
        %p959 = pneg %p78
      $region30: #{coatt_layer_forward.5} parent=27 // pred_check_branch
        %961 = sbr.rel (%p959) target = $region32
      $region31: #{coatt_layer_forward.5} parent=27 // pred_region
        _
      $region32: #{coatt_layer_forward.5} parent=27 // pred_fallthru
        _
    $region28: #{coatt_layer_forward.5} parent=5 // pred_fallthru
      _
    %p962 = scmp.le.s32.totalorder 2, %s8
    // Predicated region
    $region33: #{coatt_layer_forward.5} parent=5 // pred_check
      %p963 = pneg %p962
    $region34: #{coatt_layer_forward.5} parent=5 // pred_check_branch
      %965 = sbr.rel (%p963) target = $region36
    $region35: #{coatt_layer_forward.5} parent=5 // pred_region
      %s966 = ssub.s32 %s8, 2
      // Predicated region
      $region37: #{coatt_layer_forward.5} parent=35 // pred_check
        %p967 = pneg %p84
      $region38: #{coatt_layer_forward.5} parent=35 // pred_check_branch
        %969 = sbr.rel (%p967) target = $region40
      $region39: #{coatt_layer_forward.5} parent=35 // pred_region
        %p970 = scmp.lt.s32.totalorder %s14, 1
        %s971 = scalar_select %p970, %s14, 1
        %s972 = smul.addr %s971, 2
        %s973 = scalar_lea.vmem %s2, %s972
      $region40: #{coatt_layer_forward.5} parent=35 // pred_fallthru
        _
    $region36: #{coatt_layer_forward.5} parent=5 // pred_fallthru
      _
  $region6: #{coatt_layer_forward.5} parent=0 // loop_footer
    %s12 = sadd.s32 1, %s8
  $region7: #{coatt_layer_forward.5} parent=0 // loop_footer_branch
    %7 = sbr.rel target = $region3
  $region8: #{coatt_layer_forward.5} parent=0 // loop_exit
    _

</llo_original>
